<compile_context>
chip_gen: v6e
topology: v6e:2x2x1
jax: 0.10.0
libtpu: 0.0.40
codegen_flags: <defaults>
</compile_context>

<pallas_src>
import math
import functools

import jax
import jax.numpy as jnp
from jax import lax
from jax.experimental import pallas as pl
from jax.experimental.pallas import tpu as pltpu

LN_EPS = 1e-5
# MXU operand dtype; accumulation, LayerNorm/softmax statistics and residuals stay f32.
# Set to jnp.float32 if bitwise-closer parity with the fp32 PyTorch module is required.
COMPUTE_DTYPE = jnp.bfloat16


def _tpu_vmem_capacity_bytes():
    """Physical VMEM per TensorCore; falls back to 128 MiB if the query fails."""
    try:
        cap = getattr(pltpu.get_tpu_info(), "vmem_capacity_bytes", None)
    except Exception:
        cap = None
    return int(cap) if cap else 128 * 1024 * 1024


def _vmem_limit_bytes(cap):
    # ~75% of physical VMEM: ~48 MiB on v7x (64-MiB parts), ~96 MiB on v5e/v6e.
    return int(min(cap * 3 // 4, 100 * 1024 * 1024))


def _layer_norm_f32(x, w, b):
    """LayerNorm over the last dim, all statistics in f32. w/b are (1, C)."""
    mu = jnp.mean(x, axis=-1, keepdims=True)
    var = jnp.mean((x - mu) ** 2, axis=-1, keepdims=True)
    return (x - mu) * lax.rsqrt(var + LN_EPS) * w + b


def _const_spec(shape):
    """Single-buffered BlockSpec for a grid-invariant operand (weights/biases/LN params).

    The index never changes, so a second pipeline buffer is pure VMEM waste.
    Works for both plain-grid and scalar-prefetch index-map signatures (*args).
    """
    nd = len(shape)
    return pl.BlockSpec(shape, lambda *_: (0,) * nd, pipeline_mode=pl.Buffered(1))


# --------------------------- kernel A: norm1 + attention ---------------------------

def _attn_block_kernel(x_ref, ln_w_ref, ln_b_ref, wq_ref, wk_ref, wv_ref,
                       proj_w_ref, proj_b_ref, xout_ref, cls_ref, acc_ref,
                       *, num_heads, bt, seq_len):
    """Fused norm1 + multi-head attention + proj + residual for `bt` batch elements.

    x_ref:   (bt*seq_len, C) input block (flattened batch x tokens).
    cls_ref: (bt, 1, seq_len) f32 mean-over-heads attention row of the cls token
             (includes the cls->cls column so the store stays lane-dense).
    acc_ref: (bt, seq_len, C) bf16 VMEM scratch holding the concatenated head outputs.
    """
    C = x_ref.shape[-1]
    hd = C // num_heads
    scale = hd ** -0.5

    x = x_ref[...].astype(jnp.float32)                            # (bt*N, C)
    xn = _layer_norm_f32(x, ln_w_ref[...], ln_b_ref[...])
    xn_c = xn.astype(COMPUTE_DTYPE)

    # Three (bt*N, C) x (C, C) matmuls instead of one fused (bt*N, 3C): each f32 result
    # is cast to bf16 immediately, bounding the peak VMEM/vreg footprint. K stays full
    # width so MXU efficiency is unchanged. Scale goes on q in f32 before the cast.
    q = (jnp.dot(xn_c, wq_ref[...], preferred_element_type=jnp.float32) * scale)
    q = q.astype(COMPUTE_DTYPE).reshape(bt, seq_len, C)
    k = jnp.dot(xn_c, wk_ref[...], preferred_element_type=jnp.float32)
    k = k.astype(COMPUTE_DTYPE).reshape(bt, seq_len, C)
    v = jnp.dot(xn_c, wv_ref[...], preferred_element_type=jnp.float32)
    v = v.astype(COMPUTE_DTYPE).reshape(bt, seq_len, C)

    cls_acc = jnp.zeros((bt, seq_len), jnp.float32)
    # TODO(synk): heads stay a short static loop: a lax.fori_loop would need dynamic
    # lane slices at multiples of head_dim (<128) which lower poorly, and pairing heads
    # into 128-lane groups needs a (B,N,H,hd)->(B,H,N,hd) relayout that doesn't lower
    # cleanly. Per-head outputs go straight to the bf16 scratch so only the small cls
    # row is carried across iterations.
    for h in range(num_heads):
        qh = q[:, :, h * hd:(h + 1) * hd]
        kh = k[:, :, h * hd:(h + 1) * hd]
        vh = v[:, :, h * hd:(h + 1) * hd]

        s = jnp.einsum('bnd,bmd->bnm', qh, kh,
                       preferred_element_type=jnp.float32)        # (bt, N, N)
        s = s - jnp.max(s, axis=-1, keepdims=True)
        e = jnp.exp(s)
        denom = jnp.sum(e, axis=-1, keepdims=True)
        # EUP approximate reciprocal for the attention output; EXACT division for the
        # cls row that feeds lax.top_k (token selection must not be perturbed).
        p = e * pl.reciprocal(denom, approx=True)
        cls_acc = cls_acc + e[:, 0, :] / denom[:, 0, :]

        o = jnp.einsum('bnm,bmd->bnd', p.astype(COMPUTE_DTYPE), vh,
                       preferred_element_type=jnp.float32)        # (bt, N, hd)
        acc_ref[:, :, h * hd:(h + 1) * hd] = o.astype(COMPUTE_DTYPE)

    attn_out = acc_ref[...].reshape(bt * seq_len, C)              # bf16
    y = jnp.dot(attn_out, proj_w_ref[...], preferred_element_type=jnp.float32)
    y = y + proj_b_ref[...]

    xout_ref[...] = (x + y).astype(xout_ref.dtype)                # residual (drop_path=id)
    cls_ref[:, 0, :] = (cls_acc * (1.0 / num_heads)).astype(cls_ref.dtype)


# ------------------------------ kernel B: norm2 + MLP ------------------------------

def _mlp_rows_kernel(x_ref, ln_w_ref, ln_b_ref, w1_ref, b1_ref, w2_ref, b2_ref,
                     out_ref, *, approximate_gelu):
    """Fused norm2 + MLP (fc1 -> GELU -> fc2) + residual on a (Tm, C) row tile."""
    x = x_ref[...].astype(jnp.float32)
    xn = _layer_norm_f32(x, ln_w_ref[...], ln_b_ref[...])
    h = jnp.dot(xn.astype(COMPUTE_DTYPE), w1_ref[...],
                preferred_element_type=jnp.float32) + b1_ref[...]
    h = jax.nn.gelu(h, approximate=approximate_gelu)
    y = jnp.dot(h.astype(COMPUTE_DTYPE), w2_ref[...],
                preferred_element_type=jnp.float32) + b2_ref[...]
    out_ref[...] = (x + y).astype(out_ref.dtype)


def _gather_mlp_kernel(idx_ref, x_ref, ln_w_ref, ln_b_ref, w1_ref, b1_ref, w2_ref,
                       b2_ref, out_ref, xg_ref, *, n_rows, approximate_gelu):
    """Fused token gather (cls + kept tokens) + norm2 + MLP + residual, one batch/step.

    idx_ref: scalar-prefetched (B, n_rows) int32 row table in SMEM (row 0 = cls token).
    x_ref:   (N, C) un-gathered token block of the current batch element.
    xg_ref:  (n_rows, C) f32 VMEM scratch for the gathered tokens.
    """
    b = pl.program_id(0)

    def gather_row(m, carry):
        row = idx_ref[b, m]
        xg_ref[pl.ds(m, 1), :] = x_ref[pl.ds(row, 1), :].astype(jnp.float32)
        return carry
    lax.fori_loop(0, n_rows, gather_row, 0)

    xg = xg_ref[...]
    xn = _layer_norm_f32(xg, ln_w_ref[...], ln_b_ref[...])
    h = jnp.dot(xn.astype(COMPUTE_DTYPE), w1_ref[...],
                preferred_element_type=jnp.float32) + b1_ref[...]
    h = jax.nn.gelu(h, approximate=approximate_gelu)
    y = jnp.dot(h.astype(COMPUTE_DTYPE), w2_ref[...],
                preferred_element_type=jnp.float32) + b2_ref[...]
    out_ref[...] = (xg + y).astype(out_ref.dtype)


# ----------------------------------- wrapper ---------------------------------------

def _pick_batch_block(b, n, cap):
    """Largest divisor of b (<= cap) keeping the flat (bt*N, C) block (8,128)-legal,
    preferring choices that give a grid of length >= 2 (pipelining / megacore)."""
    best = None
    for d in range(min(b, cap), 0, -1):
        if b % d:
            continue
        if d != b and (d * n) % 8 != 0:
            continue
        if best is None:
            best = d
        if b // d >= 2:
            return d
    return best if best is not None else b


def token_drop_block(x, params, *, num_heads, module_keep_rate,
                     keep_rate=None, tokens=None, get_idx=False,
                     batch_block=None, mlp_row_block=512, approximate_gelu=False):
    """Forward pass of TokenDropBlock (eval mode). Returns (x, n_tokens, idx-or-None).

    Accepts f32 or bf16 `x` (bf16 I/O halves the dominant HBM DMA of both kernels);
    LayerNorm/softmax statistics and residual adds always run in f32 inside the kernels,
    matmuls use bf16 MXU operands with f32 accumulation.
    """
    if keep_rate is None:
        keep_rate = module_keep_rate
    B, N, C = x.shape
    Hm = params["fc1_w"].shape[1]
    itemsize = jnp.dtype(x.dtype).itemsize

    vmem_cap = _tpu_vmem_capacity_bytes()
    cparams = pltpu.CompilerParams(
        dimension_semantics=("parallel",),
        vmem_limit_bytes=_vmem_limit_bytes(vmem_cap))
    if batch_block is None:
        batch_block = 4 if vmem_cap <= 64 * 1024 * 1024 else 8   # v7x vs v5e/v6e

    # bf16 copies of the matmul weights (LN params / biases stay f32).
    qkv_w = params["qkv_w"].astype(COMPUTE_DTYPE)
    wq, wk, wv = qkv_w[:, :C], qkv_w[:, C:2 * C], qkv_w[:, 2 * C:]
    proj_w = params["proj_w"].astype(COMPUTE_DTYPE)
    fc1_w = params["fc1_w"].astype(COMPUTE_DTYPE)
    fc2_w = params["fc2_w"].astype(COMPUTE_DTYPE)

    # ---- kernel A: norm1 + attention + proj + residual (bt batch elements / step) ----
    bt = _pick_batch_block(B, N, batch_block)
    x2 = x.reshape(B * N, C)
    attn_cost = pl.CostEstimate(
        flops=int(2 * B * N * C * (4 * C + 2 * N)),
        transcendentals=int(B * num_heads * N * N),
        bytes_accessed=int(2 * B * N * C * itemsize + B * N * 4 + 8 * C * C))

    attn_fn = pl.pallas_call(
        functools.partial(_attn_block_kernel, num_heads=num_heads, bt=bt, seq_len=N),
        grid=(B // bt,),
        in_specs=[
            pl.BlockSpec((bt * N, C), lambda i: (i, 0)),          # x (flattened tokens)
            _const_spec((1, C)),                                  # ln1 weight
            _const_spec((1, C)),                                  # ln1 bias
            _const_spec((C, C)),                                  # Wq (in,out) bf16
            _const_spec((C, C)),                                  # Wk
            _const_spec((C, C)),                                  # Wv
            _const_spec((C, C)),                                  # proj weight
            _const_spec((1, C)),                                  # proj bias
        ],
        out_specs=[
            pl.BlockSpec((bt * N, C), lambda i: (i, 0)),          # x + attn(norm1(x))
            pl.BlockSpec((bt, 1, N), lambda i: (i, 0, 0)),        # cls attention row
        ],
        out_shape=[
            jax.ShapeDtypeStruct((B * N, C), x.dtype),
            jax.ShapeDtypeStruct((B, 1, N), jnp.float32),
        ],
        scratch_shapes=[pltpu.VMEM((bt, N, C), COMPUTE_DTYPE)],   # bf16 head-out scratch
        compiler_params=cparams,
        cost_estimate=attn_cost,
    )
    x_after2, cls_full = attn_fn(x2, params["ln1_w"], params["ln1_b"],
                                 wq, wk, wv, proj_w, params["proj_b"])
    x_after = x_after2.reshape(B, N, C)
    cls_attn = cls_full[:, 0, 1:]                                 # drop cls->cls column

    # ---- token selection (matches TokenDropAttention keep-rate branch) ----
    idx = None
    left_tokens = N - 1
    if (module_keep_rate < 1 and keep_rate < 1) or (tokens is not None):
        left_tokens = math.ceil(keep_rate * (N - 1))
        if tokens is not None:
            left_tokens = tokens
        if left_tokens != N - 1:
            assert left_tokens >= 1
            # TODO(synk): lax.top_k has no Pallas equivalent; tie-breaking on equal
            # cls-attention scores may differ from torch.topk.
            _, idx = lax.top_k(cls_attn, left_tokens)             # sorted descending

    mlp_common = (params["ln2_w"], params["ln2_b"], fc1_w, params["fc1_b"],
                  fc2_w, params["fc2_b"])

    if idx is not None:
        # ---- kernel B (drop path): fused gather(cls + top-k) + norm2 + MLP + residual.
        # The gathered (B, M, C) tensor never round-trips through HBM: idx is
        # scalar-prefetched to SMEM and rows are gathered in VMEM inside the kernel. ----
        M = left_tokens + 1
        idx_rows = jnp.concatenate(
            [jnp.zeros((B, 1), jnp.int32), (idx + 1).astype(jnp.int32)], axis=1)  # (B,M)
        mlp_cost = pl.CostEstimate(
            flops=int(4 * B * M * C * Hm),
            transcendentals=int(B * M * Hm),
            bytes_accessed=int(B * (N + M) * C * itemsize + 4 * C * Hm))
        grid_spec = pltpu.PrefetchScalarGridSpec(
            num_scalar_prefetch=1,
            grid=(B,),
            in_specs=[
                pl.BlockSpec((pl.Squeezed(), N, C), lambda b, idx_r: (b, 0, 0)),
                _const_spec((1, C)), _const_spec((1, C)),
                _const_spec((C, Hm)), _const_spec((1, Hm)),
                _const_spec((Hm, C)), _const_spec((1, C)),
            ],
            out_specs=pl.BlockSpec((pl.Squeezed(), M, C), lambda b, idx_r: (b, 0, 0)),
            scratch_shapes=[pltpu.VMEM((M, C), jnp.float32)],
        )
        mlp_fn = pl.pallas_call(
            functools.partial(_gather_mlp_kernel, n_rows=M,
                              approximate_gelu=approximate_gelu),
            grid_spec=grid_spec,
            out_shape=jax.ShapeDtypeStruct((B, M, C), x.dtype),
            compiler_params=cparams,
            cost_estimate=mlp_cost,
        )
        x_final = mlp_fn(idx_rows, x_after, *mlp_common)
    else:
        # ---- kernel B (no drop): row-tiled norm2 + MLP + residual over all tokens ----
        R = B * N
        tm = R if R <= mlp_row_block else mlp_row_block           # mlp_row_block % 8 == 0
        mlp_cost = pl.CostEstimate(
            flops=int(4 * R * C * Hm),
            transcendentals=int(R * Hm),
            bytes_accessed=int(2 * R * C * itemsize + 4 * C * Hm))
        mlp_fn = pl.pallas_call(
            functools.partial(_mlp_rows_kernel, approximate_gelu=approximate_gelu),
            grid=(pl.cdiv(R, tm),),
            in_specs=[
                pl.BlockSpec((tm, C), lambda i: (i, 0)),
                _const_spec((1, C)), _const_spec((1, C)),
                _const_spec((C, Hm)), _const_spec((1, Hm)),
                _const_spec((Hm, C)), _const_spec((1, C)),
            ],
            out_specs=pl.BlockSpec((tm, C), lambda i: (i, 0)),
            out_shape=jax.ShapeDtypeStruct((R, C), x.dtype),
            compiler_params=cparams,
            cost_estimate=mlp_cost,
        )
        x_final = mlp_fn(x_after.reshape(R, C), *mlp_common).reshape(B, N, C)

    n_tokens = x_final.shape[1] - 1
    if get_idx and idx is not None:
        return x_final, n_tokens, idx
    return x_final, n_tokens, None


def init_params(key, dim, mlp_hidden_dim):
    ks = jax.random.split(key, 6)
    s = 0.02
    return {
        "ln1_w": jnp.ones((1, dim), jnp.float32),
        "ln1_b": jnp.zeros((1, dim), jnp.float32),
        "qkv_w": s * jax.random.normal(ks[0], (dim, 3 * dim), jnp.float32),
        "proj_w": s * jax.random.normal(ks[1], (dim, dim), jnp.float32),
        "proj_b": s * jax.random.normal(ks[2], (1, dim), jnp.float32),
        "ln2_w": jnp.ones((1, dim), jnp.float32),
        "ln2_b": jnp.zeros((1, dim), jnp.float32),
        "fc1_w": s * jax.random.normal(ks[3], (dim, mlp_hidden_dim), jnp.float32),
        "fc1_b": jnp.zeros((1, mlp_hidden_dim), jnp.float32),
        "fc2_w": s * jax.random.normal(ks[4], (mlp_hidden_dim, dim), jnp.float32),
        "fc2_b": jnp.zeros((1, dim), jnp.float32),
    }


if __name__ == "__main__":
    # Small shapes consistent with TokenDropBlock(dim=64, num_heads=4, mlp_dim=128.0,
    # keep_rate=0.5) in eval mode: x is (B, N, C) with the cls token at position 0.
    B, N, C = 2, 16, 64           # 1 cls token + 15 patch tokens
    num_heads = 4
    mlp_hidden_dim = int(128.0)   # mlp_hidden_dim = int(mlp_dim)
    keep_rate = 0.5               # keeps ceil(0.5 * 15) = 8 non-cls tokens

    key = jax.random.PRNGKey(0)
    kx, kp = jax.random.split(key)
    x = jax.random.normal(kx, (B, N, C), jnp.float32)
    params = init_params(kp, C, mlp_hidden_dim)

    # Token-dropping path (keep_rate < 1): attention kernel + fused gather-MLP kernel.
    out, n_tokens, idx = token_drop_block(
        x, params, num_heads=num_heads, module_keep_rate=keep_rate, get_idx=True)
    out = jax.block_until_ready(out)

    expected_tokens = math.ceil(keep_rate * (N - 1))
    assert out.shape == (B, expected_tokens + 1, C), out.shape
    assert n_tokens == expected_tokens
    assert idx.shape == (B, expected_tokens)
    assert bool(jnp.all(jnp.isfinite(out)))

    # No-drop path (keep_rate == 1): attention kernel + row-tiled MLP kernel.
    out_full, n_full, idx_none = token_drop_block(
        x, params, num_heads=num_heads, module_keep_rate=1.0, get_idx=True)
    out_full = jax.block_until_ready(out_full)
    assert out_full.shape == (B, N, C), out_full.shape
    assert n_full == N - 1 and idx_none is None
    assert bool(jnp.all(jnp.isfinite(out_full)))

    print("KERNEL_OK")
</pallas_src>

<mosaic_0001>
module attributes {stable_mosaic.version = 11 : i64} {
  func.func @_attn_block_kernel(%arg0: i32, %arg1: memref<16x64xf32, #tpu.memory_space<vmem>>, %arg2: memref<1x64xf32, #tpu.memory_space<vmem>>, %arg3: memref<1x64xf32, #tpu.memory_space<vmem>>, %arg4: memref<64x64xbf16, #tpu.memory_space<vmem>>, %arg5: memref<64x64xbf16, #tpu.memory_space<vmem>>, %arg6: memref<64x64xbf16, #tpu.memory_space<vmem>>, %arg7: memref<64x64xbf16, #tpu.memory_space<vmem>>, %arg8: memref<1x64xf32, #tpu.memory_space<vmem>>, %arg9: memref<16x64xf32, #tpu.memory_space<vmem>>, %arg10: memref<1x1x16xf32, #tpu.memory_space<vmem>>, %arg11: memref<1x16x64xbf16, #tpu.memory_space<vmem>>) attributes {dimension_semantics = [#tpu.dimension_semantics<parallel>], iteration_bounds = array<i64: 2>, scalar_prefetch = 0 : i64, scratch_operands = 1 : i64, tpu.core_type = #tpu.core_type<tc>, window_params = [{transform_indices = @transform_0, window_bounds = array<i64: 16, 64>}, {pipeline_mode = #tpu.pipeline_mode<synchronous>, transform_indices = @transform_1, window_bounds = array<i64: 1, 64>}, {pipeline_mode = #tpu.pipeline_mode<synchronous>, transform_indices = @transform_2, window_bounds = array<i64: 1, 64>}, {pipeline_mode = #tpu.pipeline_mode<synchronous>, transform_indices = @transform_3, window_bounds = array<i64: 64, 64>}, {pipeline_mode = #tpu.pipeline_mode<synchronous>, transform_indices = @transform_4, window_bounds = array<i64: 64, 64>}, {pipeline_mode = #tpu.pipeline_mode<synchronous>, transform_indices = @transform_5, window_bounds = array<i64: 64, 64>}, {pipeline_mode = #tpu.pipeline_mode<synchronous>, transform_indices = @transform_6, window_bounds = array<i64: 64, 64>}, {pipeline_mode = #tpu.pipeline_mode<synchronous>, transform_indices = @transform_7, window_bounds = array<i64: 1, 64>}, {transform_indices = @transform_8, window_bounds = array<i64: 16, 64>}, {transform_indices = @transform_9, window_bounds = array<i64: 1, 1, 16>}]} {
    %c0 = arith.constant 0 : index
    %c0_0 = arith.constant 0 : index
    %0 = vector.load %arg1[%c0, %c0_0] : memref<16x64xf32, #tpu.memory_space<vmem>>, vector<16x64xf32>
    %c0_1 = arith.constant 0 : index
    %c0_2 = arith.constant 0 : index
    %1 = vector.load %arg2[%c0_1, %c0_2] : memref<1x64xf32, #tpu.memory_space<vmem>>, vector<1x64xf32>
    %c0_3 = arith.constant 0 : index
    %c0_4 = arith.constant 0 : index
    %2 = vector.load %arg3[%c0_3, %c0_4] : memref<1x64xf32, #tpu.memory_space<vmem>>, vector<1x64xf32>
    %cst = arith.constant dense<0.000000e+00> : vector<16xf32>
    %3 = vector.multi_reduction <add>, %0, %cst [1] : vector<16x64xf32> to vector<16xf32>
    %4 = vector.shape_cast %3 : vector<16xf32> to vector<16x1xf32>
    %cst_5 = arith.constant 6.400000e+01 : f32
    %5 = vector.broadcast %cst_5 : f32 to vector<16x1xf32>
    %6 = arith.divf %4, %5 : vector<16x1xf32>
    %7 = vector.broadcast %6 : vector<16x1xf32> to vector<16x64xf32>
    %8 = arith.subf %0, %7 : vector<16x64xf32>
    %9 = arith.mulf %8, %8 : vector<16x64xf32>
    %cst_6 = arith.constant dense<0.000000e+00> : vector<16xf32>
    %10 = vector.multi_reduction <add>, %9, %cst_6 [1] : vector<16x64xf32> to vector<16xf32>
    %11 = vector.shape_cast %10 : vector<16xf32> to vector<16x1xf32>
    %cst_7 = arith.constant 6.400000e+01 : f32
    %12 = vector.broadcast %cst_7 : f32 to vector<16x1xf32>
    %13 = arith.divf %11, %12 : vector<16x1xf32>
    %14 = vector.broadcast %6 : vector<16x1xf32> to vector<16x64xf32>
    %15 = arith.subf %0, %14 : vector<16x64xf32>
    %cst_8 = arith.constant 9.99999974E-6 : f32
    %16 = vector.broadcast %cst_8 : f32 to vector<16x1xf32>
    %17 = arith.addf %13, %16 : vector<16x1xf32>
    %18 = math.rsqrt %17 : vector<16x1xf32>
    %19 = vector.broadcast %18 : vector<16x1xf32> to vector<16x64xf32>
    %20 = arith.mulf %15, %19 : vector<16x64xf32>
    %21 = vector.broadcast %1 : vector<1x64xf32> to vector<16x64xf32>
    %22 = arith.mulf %20, %21 : vector<16x64xf32>
    %23 = vector.broadcast %2 : vector<1x64xf32> to vector<16x64xf32>
    %24 = arith.addf %22, %23 : vector<16x64xf32>
    %25 = arith.truncf %24 : vector<16x64xf32> to vector<16x64xbf16>
    %c0_9 = arith.constant 0 : index
    %c0_10 = arith.constant 0 : index
    %26 = vector.load %arg4[%c0_9, %c0_10] : memref<64x64xbf16, #tpu.memory_space<vmem>>, vector<64x64xbf16>
    %cst_11 = arith.constant dense<0.000000e+00> : vector<16x64xf32>
    %27 = tpu.matmul %25, %26, %cst_11 {dimension_numbers = #tpu.dot_dimension_numbers<[1], [0], [0], [1], [0, 0, 1, 1], [], []>} : vector<16x64xbf16>, vector<64x64xbf16>, vector<16x64xf32> -> vector<16x64xf32>
    %cst_12 = arith.constant 2.500000e-01 : f32
    %28 = vector.broadcast %cst_12 : f32 to vector<16x64xf32>
    %29 = arith.mulf %27, %28 : vector<16x64xf32>
    %30 = arith.truncf %29 : vector<16x64xf32> to vector<16x64xbf16>
    %31 = vector.shape_cast %30 : vector<16x64xbf16> to vector<1x16x64xbf16>
    %c0_13 = arith.constant 0 : index
    %c0_14 = arith.constant 0 : index
    %32 = vector.load %arg5[%c0_13, %c0_14] : memref<64x64xbf16, #tpu.memory_space<vmem>>, vector<64x64xbf16>
    %cst_15 = arith.constant dense<0.000000e+00> : vector<16x64xf32>
    %33 = tpu.matmul %25, %32, %cst_15 {dimension_numbers = #tpu.dot_dimension_numbers<[1], [0], [0], [1], [0, 0, 1, 1], [], []>} : vector<16x64xbf16>, vector<64x64xbf16>, vector<16x64xf32> -> vector<16x64xf32>
    %34 = arith.truncf %33 : vector<16x64xf32> to vector<16x64xbf16>
    %35 = vector.shape_cast %34 : vector<16x64xbf16> to vector<1x16x64xbf16>
    %c0_16 = arith.constant 0 : index
    %c0_17 = arith.constant 0 : index
    %36 = vector.load %arg6[%c0_16, %c0_17] : memref<64x64xbf16, #tpu.memory_space<vmem>>, vector<64x64xbf16>
    %cst_18 = arith.constant dense<0.000000e+00> : vector<16x64xf32>
    %37 = tpu.matmul %25, %36, %cst_18 {dimension_numbers = #tpu.dot_dimension_numbers<[1], [0], [0], [1], [0, 0, 1, 1], [], []>} : vector<16x64xbf16>, vector<64x64xbf16>, vector<16x64xf32> -> vector<16x64xf32>
    %38 = arith.truncf %37 : vector<16x64xf32> to vector<16x64xbf16>
    %39 = vector.shape_cast %38 : vector<16x64xbf16> to vector<1x16x64xbf16>
    %cst_19 = arith.constant 0.000000e+00 : f32
    %40 = vector.broadcast %cst_19 : f32 to vector<1x16xf32>
    %41 = vector.extract_strided_slice %31 {offsets = [0, 0, 0], sizes = [1, 16, 16], strides = [1, 1, 1]} : vector<1x16x64xbf16> to vector<1x16x16xbf16>
    %42 = vector.extract_strided_slice %35 {offsets = [0, 0, 0], sizes = [1, 16, 16], strides = [1, 1, 1]} : vector<1x16x64xbf16> to vector<1x16x16xbf16>
    %43 = vector.extract_strided_slice %39 {offsets = [0, 0, 0], sizes = [1, 16, 16], strides = [1, 1, 1]} : vector<1x16x64xbf16> to vector<1x16x16xbf16>
    "tpu.trace_start"() <{level = 10 : i32, message = "bnd,bmd->bnm"}> : () -> ()
    %cst_20 = arith.constant dense<0.000000e+00> : vector<1x16x16xf32>
    %44 = tpu.matmul %41, %42, %cst_20 {dimension_numbers = #tpu.dot_dimension_numbers<[2], [2], [1], [1], [0, 0, 0, 1, 1, 1], [0], [0]>} : vector<1x16x16xbf16>, vector<1x16x16xbf16>, vector<1x16x16xf32> -> vector<1x16x16xf32>
    "tpu.trace_stop"() : () -> ()
    %cst_21 = arith.constant dense<0xFF800000> : vector<1x16xf32>
    %45 = vector.multi_reduction <maximumf>, %44, %cst_21 [2] : vector<1x16x16xf32> to vector<1x16xf32>
    %46 = vector.shape_cast %45 : vector<1x16xf32> to vector<1x16x1xf32>
    %47 = vector.broadcast %46 : vector<1x16x1xf32> to vector<1x16x16xf32>
    %48 = arith.subf %44, %47 : vector<1x16x16xf32>
    %49 = math.exp %48 : vector<1x16x16xf32>
    %cst_22 = arith.constant dense<0.000000e+00> : vector<1x16xf32>
    %50 = vector.multi_reduction <add>, %49, %cst_22 [2] : vector<1x16x16xf32> to vector<1x16xf32>
    %51 = vector.shape_cast %50 : vector<1x16xf32> to vector<1x16x1xf32>
    %52 = tpu.reciprocal %51 {approx = true} : vector<1x16x1xf32> -> vector<1x16x1xf32>
    %53 = vector.broadcast %52 : vector<1x16x1xf32> to vector<1x16x16xf32>
    %54 = arith.mulf %49, %53 : vector<1x16x16xf32>
    %55 = vector.extract_strided_slice %49 {offsets = [0, 0, 0], sizes = [1, 1, 16], strides = [1, 1, 1]} : vector<1x16x16xf32> to vector<1x1x16xf32>
    %56 = vector.shape_cast %55 : vector<1x1x16xf32> to vector<1x16xf32>
    %57 = vector.extract_strided_slice %51 {offsets = [0, 0, 0], sizes = [1, 1, 1], strides = [1, 1, 1]} : vector<1x16x1xf32> to vector<1x1x1xf32>
    %58 = vector.shape_cast %57 : vector<1x1x1xf32> to vector<1x1xf32>
    %59 = vector.broadcast %58 : vector<1x1xf32> to vector<1x16xf32>
    %60 = arith.divf %56, %59 : vector<1x16xf32>
    %61 = arith.addf %40, %60 : vector<1x16xf32>
    %62 = arith.truncf %54 : vector<1x16x16xf32> to vector<1x16x16xbf16>
    "tpu.trace_start"() <{level = 10 : i32, message = "bnm,bmd->bnd"}> : () -> ()
    %cst_23 = arith.constant dense<0.000000e+00> : vector<1x16x16xf32>
    %63 = tpu.matmul %62, %43, %cst_23 {dimension_numbers = #tpu.dot_dimension_numbers<[2], [1], [1], [2], [0, 0, 0, 1, 1, 2], [0], [0]>} : vector<1x16x16xbf16>, vector<1x16x16xbf16>, vector<1x16x16xf32> -> vector<1x16x16xf32>
    "tpu.trace_stop"() : () -> ()
    %64 = arith.truncf %63 : vector<1x16x16xf32> to vector<1x16x16xbf16>
    %c0_24 = arith.constant 0 : index
    %c0_25 = arith.constant 0 : index
    %c0_26 = arith.constant 0 : index
    %65 = vector.load %arg11[%c0_24, %c0_25, %c0_26] : memref<1x16x64xbf16, #tpu.memory_space<vmem>>, vector<1x16x16xbf16>
    tpu.vector_store %arg11[%c0_24, %c0_25, %c0_26], %64 {strides = array<i32>} : memref<1x16x64xbf16, #tpu.memory_space<vmem>>, vector<1x16x16xbf16>,
    %66 = vector.extract_strided_slice %31 {offsets = [0, 0, 16], sizes = [1, 16, 16], strides = [1, 1, 1]} : vector<1x16x64xbf16> to vector<1x16x16xbf16>
    %67 = vector.extract_strided_slice %35 {offsets = [0, 0, 16], sizes = [1, 16, 16], strides = [1, 1, 1]} : vector<1x16x64xbf16> to vector<1x16x16xbf16>
    %68 = vector.extract_strided_slice %39 {offsets = [0, 0, 16], sizes = [1, 16, 16], strides = [1, 1, 1]} : vector<1x16x64xbf16> to vector<1x16x16xbf16>
    "tpu.trace_start"() <{level = 10 : i32, message = "bnd,bmd->bnm"}> : () -> ()
    %cst_27 = arith.constant dense<0.000000e+00> : vector<1x16x16xf32>
    %69 = tpu.matmul %66, %67, %cst_27 {dimension_numbers = #tpu.dot_dimension_numbers<[2], [2], [1], [1], [0, 0, 0, 1, 1, 1], [0], [0]>} : vector<1x16x16xbf16>, vector<1x16x16xbf16>, vector<1x16x16xf32> -> vector<1x16x16xf32>
    "tpu.trace_stop"() : () -> ()
    %cst_28 = arith.constant dense<0xFF800000> : vector<1x16xf32>
    %70 = vector.multi_reduction <maximumf>, %69, %cst_28 [2] : vector<1x16x16xf32> to vector<1x16xf32>
    %71 = vector.shape_cast %70 : vector<1x16xf32> to vector<1x16x1xf32>
    %72 = vector.broadcast %71 : vector<1x16x1xf32> to vector<1x16x16xf32>
    %73 = arith.subf %69, %72 : vector<1x16x16xf32>
    %74 = math.exp %73 : vector<1x16x16xf32>
    %cst_29 = arith.constant dense<0.000000e+00> : vector<1x16xf32>
    %75 = vector.multi_reduction <add>, %74, %cst_29 [2] : vector<1x16x16xf32> to vector<1x16xf32>
    %76 = vector.shape_cast %75 : vector<1x16xf32> to vector<1x16x1xf32>
    %77 = tpu.reciprocal %76 {approx = true} : vector<1x16x1xf32> -> vector<1x16x1xf32>
    %78 = vector.broadcast %77 : vector<1x16x1xf32> to vector<1x16x16xf32>
    %79 = arith.mulf %74, %78 : vector<1x16x16xf32>
    %80 = vector.extract_strided_slice %74 {offsets = [0, 0, 0], sizes = [1, 1, 16], strides = [1, 1, 1]} : vector<1x16x16xf32> to vector<1x1x16xf32>
    %81 = vector.shape_cast %80 : vector<1x1x16xf32> to vector<1x16xf32>
    %82 = vector.extract_strided_slice %76 {offsets = [0, 0, 0], sizes = [1, 1, 1], strides = [1, 1, 1]} : vector<1x16x1xf32> to vector<1x1x1xf32>
    %83 = vector.shape_cast %82 : vector<1x1x1xf32> to vector<1x1xf32>
    %84 = vector.broadcast %83 : vector<1x1xf32> to vector<1x16xf32>
    %85 = arith.divf %81, %84 : vector<1x16xf32>
    %86 = arith.addf %61, %85 : vector<1x16xf32>
    %87 = arith.truncf %79 : vector<1x16x16xf32> to vector<1x16x16xbf16>
    "tpu.trace_start"() <{level = 10 : i32, message = "bnm,bmd->bnd"}> : () -> ()
    %cst_30 = arith.constant dense<0.000000e+00> : vector<1x16x16xf32>
    %88 = tpu.matmul %87, %68, %cst_30 {dimension_numbers = #tpu.dot_dimension_numbers<[2], [1], [1], [2], [0, 0, 0, 1, 1, 2], [0], [0]>} : vector<1x16x16xbf16>, vector<1x16x16xbf16>, vector<1x16x16xf32> -> vector<1x16x16xf32>
    "tpu.trace_stop"() : () -> ()
    %89 = arith.truncf %88 : vector<1x16x16xf32> to vector<1x16x16xbf16>
    %c0_31 = arith.constant 0 : index
    %c0_32 = arith.constant 0 : index
    %c16 = arith.constant 16 : index
    %90 = vector.load %arg11[%c0_31, %c0_32, %c16] : memref<1x16x64xbf16, #tpu.memory_space<vmem>>, vector<1x16x16xbf16>
    tpu.vector_store %arg11[%c0_31, %c0_32, %c16], %89 {strides = array<i32>} : memref<1x16x64xbf16, #tpu.memory_space<vmem>>, vector<1x16x16xbf16>,
    %91 = vector.extract_strided_slice %31 {offsets = [0, 0, 32], sizes = [1, 16, 16], strides = [1, 1, 1]} : vector<1x16x64xbf16> to vector<1x16x16xbf16>
    %92 = vector.extract_strided_slice %35 {offsets = [0, 0, 32], sizes = [1, 16, 16], strides = [1, 1, 1]} : vector<1x16x64xbf16> to vector<1x16x16xbf16>
    %93 = vector.extract_strided_slice %39 {offsets = [0, 0, 32], sizes = [1, 16, 16], strides = [1, 1, 1]} : vector<1x16x64xbf16> to vector<1x16x16xbf16>
    "tpu.trace_start"() <{level = 10 : i32, message = "bnd,bmd->bnm"}> : () -> ()
    %cst_33 = arith.constant dense<0.000000e+00> : vector<1x16x16xf32>
    %94 = tpu.matmul %91, %92, %cst_33 {dimension_numbers = #tpu.dot_dimension_numbers<[2], [2], [1], [1], [0, 0, 0, 1, 1, 1], [0], [0]>} : vector<1x16x16xbf16>, vector<1x16x16xbf16>, vector<1x16x16xf32> -> vector<1x16x16xf32>
    "tpu.trace_stop"() : () -> ()
    %cst_34 = arith.constant dense<0xFF800000> : vector<1x16xf32>
    %95 = vector.multi_reduction <maximumf>, %94, %cst_34 [2] : vector<1x16x16xf32> to vector<1x16xf32>
    %96 = vector.shape_cast %95 : vector<1x16xf32> to vector<1x16x1xf32>
    %97 = vector.broadcast %96 : vector<1x16x1xf32> to vector<1x16x16xf32>
    %98 = arith.subf %94, %97 : vector<1x16x16xf32>
    %99 = math.exp %98 : vector<1x16x16xf32>
    %cst_35 = arith.constant dense<0.000000e+00> : vector<1x16xf32>
    %100 = vector.multi_reduction <add>, %99, %cst_35 [2] : vector<1x16x16xf32> to vector<1x16xf32>
    %101 = vector.shape_cast %100 : vector<1x16xf32> to vector<1x16x1xf32>
    %102 = tpu.reciprocal %101 {approx = true} : vector<1x16x1xf32> -> vector<1x16x1xf32>
    %103 = vector.broadcast %102 : vector<1x16x1xf32> to vector<1x16x16xf32>
    %104 = arith.mulf %99, %103 : vector<1x16x16xf32>
    %105 = vector.extract_strided_slice %99 {offsets = [0, 0, 0], sizes = [1, 1, 16], strides = [1, 1, 1]} : vector<1x16x16xf32> to vector<1x1x16xf32>
    %106 = vector.shape_cast %105 : vector<1x1x16xf32> to vector<1x16xf32>
    %107 = vector.extract_strided_slice %101 {offsets = [0, 0, 0], sizes = [1, 1, 1], strides = [1, 1, 1]} : vector<1x16x1xf32> to vector<1x1x1xf32>
    %108 = vector.shape_cast %107 : vector<1x1x1xf32> to vector<1x1xf32>
    %109 = vector.broadcast %108 : vector<1x1xf32> to vector<1x16xf32>
    %110 = arith.divf %106, %109 : vector<1x16xf32>
    %111 = arith.addf %86, %110 : vector<1x16xf32>
    %112 = arith.truncf %104 : vector<1x16x16xf32> to vector<1x16x16xbf16>
    "tpu.trace_start"() <{level = 10 : i32, message = "bnm,bmd->bnd"}> : () -> ()
    %cst_36 = arith.constant dense<0.000000e+00> : vector<1x16x16xf32>
    %113 = tpu.matmul %112, %93, %cst_36 {dimension_numbers = #tpu.dot_dimension_numbers<[2], [1], [1], [2], [0, 0, 0, 1, 1, 2], [0], [0]>} : vector<1x16x16xbf16>, vector<1x16x16xbf16>, vector<1x16x16xf32> -> vector<1x16x16xf32>
    "tpu.trace_stop"() : () -> ()
    %114 = arith.truncf %113 : vector<1x16x16xf32> to vector<1x16x16xbf16>
    %c0_37 = arith.constant 0 : index
    %c0_38 = arith.constant 0 : index
    %c32 = arith.constant 32 : index
    %115 = vector.load %arg11[%c0_37, %c0_38, %c32] : memref<1x16x64xbf16, #tpu.memory_space<vmem>>, vector<1x16x16xbf16>
    tpu.vector_store %arg11[%c0_37, %c0_38, %c32], %114 {strides = array<i32>} : memref<1x16x64xbf16, #tpu.memory_space<vmem>>, vector<1x16x16xbf16>,
    %116 = vector.extract_strided_slice %31 {offsets = [0, 0, 48], sizes = [1, 16, 16], strides = [1, 1, 1]} : vector<1x16x64xbf16> to vector<1x16x16xbf16>
    %117 = vector.extract_strided_slice %35 {offsets = [0, 0, 48], sizes = [1, 16, 16], strides = [1, 1, 1]} : vector<1x16x64xbf16> to vector<1x16x16xbf16>
    %118 = vector.extract_strided_slice %39 {offsets = [0, 0, 48], sizes = [1, 16, 16], strides = [1, 1, 1]} : vector<1x16x64xbf16> to vector<1x16x16xbf16>
    "tpu.trace_start"() <{level = 10 : i32, message = "bnd,bmd->bnm"}> : () -> ()
    %cst_39 = arith.constant dense<0.000000e+00> : vector<1x16x16xf32>
    %119 = tpu.matmul %116, %117, %cst_39 {dimension_numbers = #tpu.dot_dimension_numbers<[2], [2], [1], [1], [0, 0, 0, 1, 1, 1], [0], [0]>} : vector<1x16x16xbf16>, vector<1x16x16xbf16>, vector<1x16x16xf32> -> vector<1x16x16xf32>
    "tpu.trace_stop"() : () -> ()
    %cst_40 = arith.constant dense<0xFF800000> : vector<1x16xf32>
    %120 = vector.multi_reduction <maximumf>, %119, %cst_40 [2] : vector<1x16x16xf32> to vector<1x16xf32>
    %121 = vector.shape_cast %120 : vector<1x16xf32> to vector<1x16x1xf32>
    %122 = vector.broadcast %121 : vector<1x16x1xf32> to vector<1x16x16xf32>
    %123 = arith.subf %119, %122 : vector<1x16x16xf32>
    %124 = math.exp %123 : vector<1x16x16xf32>
    %cst_41 = arith.constant dense<0.000000e+00> : vector<1x16xf32>
    %125 = vector.multi_reduction <add>, %124, %cst_41 [2] : vector<1x16x16xf32> to vector<1x16xf32>
    %126 = vector.shape_cast %125 : vector<1x16xf32> to vector<1x16x1xf32>
    %127 = tpu.reciprocal %126 {approx = true} : vector<1x16x1xf32> -> vector<1x16x1xf32>
    %128 = vector.broadcast %127 : vector<1x16x1xf32> to vector<1x16x16xf32>
    %129 = arith.mulf %124, %128 : vector<1x16x16xf32>
    %130 = vector.extract_strided_slice %124 {offsets = [0, 0, 0], sizes = [1, 1, 16], strides = [1, 1, 1]} : vector<1x16x16xf32> to vector<1x1x16xf32>
    %131 = vector.shape_cast %130 : vector<1x1x16xf32> to vector<1x16xf32>
    %132 = vector.extract_strided_slice %126 {offsets = [0, 0, 0], sizes = [1, 1, 1], strides = [1, 1, 1]} : vector<1x16x1xf32> to vector<1x1x1xf32>
    %133 = vector.shape_cast %132 : vector<1x1x1xf32> to vector<1x1xf32>
    %134 = vector.broadcast %133 : vector<1x1xf32> to vector<1x16xf32>
    %135 = arith.divf %131, %134 : vector<1x16xf32>
    %136 = arith.addf %111, %135 : vector<1x16xf32>
    %137 = arith.truncf %129 : vector<1x16x16xf32> to vector<1x16x16xbf16>
    "tpu.trace_start"() <{level = 10 : i32, message = "bnm,bmd->bnd"}> : () -> ()
    %cst_42 = arith.constant dense<0.000000e+00> : vector<1x16x16xf32>
    %138 = tpu.matmul %137, %118, %cst_42 {dimension_numbers = #tpu.dot_dimension_numbers<[2], [1], [1], [2], [0, 0, 0, 1, 1, 2], [0], [0]>} : vector<1x16x16xbf16>, vector<1x16x16xbf16>, vector<1x16x16xf32> -> vector<1x16x16xf32>
    "tpu.trace_stop"() : () -> ()
    %139 = arith.truncf %138 : vector<1x16x16xf32> to vector<1x16x16xbf16>
    %c0_43 = arith.constant 0 : index
    %c0_44 = arith.constant 0 : index
    %c48 = arith.constant 48 : index
    %140 = vector.load %arg11[%c0_43, %c0_44, %c48] : memref<1x16x64xbf16, #tpu.memory_space<vmem>>, vector<1x16x16xbf16>
    tpu.vector_store %arg11[%c0_43, %c0_44, %c48], %139 {strides = array<i32>} : memref<1x16x64xbf16, #tpu.memory_space<vmem>>, vector<1x16x16xbf16>,
    %c0_45 = arith.constant 0 : index
    %c0_46 = arith.constant 0 : index
    %c0_47 = arith.constant 0 : index
    %141 = vector.load %arg11[%c0_45, %c0_46, %c0_47] : memref<1x16x64xbf16, #tpu.memory_space<vmem>>, vector<1x16x64xbf16>
    %142 = vector.shape_cast %141 : vector<1x16x64xbf16> to vector<16x64xbf16>
    %c0_48 = arith.constant 0 : index
    %c0_49 = arith.constant 0 : index
    %143 = vector.load %arg7[%c0_48, %c0_49] : memref<64x64xbf16, #tpu.memory_space<vmem>>, vector<64x64xbf16>
    %cst_50 = arith.constant dense<0.000000e+00> : vector<16x64xf32>
    %144 = tpu.matmul %142, %143, %cst_50 {dimension_numbers = #tpu.dot_dimension_numbers<[1], [0], [0], [1], [0, 0, 1, 1], [], []>} : vector<16x64xbf16>, vector<64x64xbf16>, vector<16x64xf32> -> vector<16x64xf32>
    %c0_51 = arith.constant 0 : index
    %c0_52 = arith.constant 0 : index
    %145 = vector.load %arg8[%c0_51, %c0_52] : memref<1x64xf32, #tpu.memory_space<vmem>>, vector<1x64xf32>
    %146 = vector.broadcast %145 : vector<1x64xf32> to vector<16x64xf32>
    %147 = arith.addf %144, %146 : vector<16x64xf32>
    %148 = arith.addf %0, %147 : vector<16x64xf32>
    %c0_53 = arith.constant 0 : index
    %c0_54 = arith.constant 0 : index
    %149 = vector.load %arg9[%c0_53, %c0_54] : memref<16x64xf32, #tpu.memory_space<vmem>>, vector<16x64xf32>
    tpu.vector_store %arg9[%c0_53, %c0_54], %148 {strides = array<i32>} : memref<16x64xf32, #tpu.memory_space<vmem>>, vector<16x64xf32>,
    %cst_55 = arith.constant 2.500000e-01 : f32
    %150 = vector.broadcast %cst_55 : f32 to vector<1x16xf32>
    %151 = arith.mulf %136, %150 : vector<1x16xf32>
    %c0_56 = arith.constant 0 : index
    %c0_57 = arith.constant 0 : index
    %c0_58 = arith.constant 0 : index
    %152 = vector.load %arg10[%c0_56, %c0_57, %c0_58] : memref<1x1x16xf32, #tpu.memory_space<vmem>>, vector<1x1x16xf32>
    %153 = vector.shape_cast %152 : vector<1x1x16xf32> to vector<1x16xf32>
    %154 = vector.shape_cast %151 : vector<1x16xf32> to vector<1x1x16xf32>
    tpu.vector_store %arg10[%c0_56, %c0_57, %c0_58], %154 {strides = array<i32>} : memref<1x1x16xf32, #tpu.memory_space<vmem>>, vector<1x1x16xf32>,
    return
  }
  func.func @transform_0(%arg0: i32) -> (i32, i32) {
    %c0_i32 = arith.constant 0 : i32
    %c0_i32_0 = arith.constant 0 : i32
    return %arg0, %c0_i32 : i32, i32
  }
  func.func @transform_1(%arg0: i32) -> (i32, i32) {
    %c0_i32 = arith.constant 0 : i32
    %c0_i32_0 = arith.constant 0 : i32
    %c0_i32_1 = arith.constant 0 : i32
    return %c0_i32, %c0_i32_0 : i32, i32
  }
  func.func @transform_2(%arg0: i32) -> (i32, i32) {
    %c0_i32 = arith.constant 0 : i32
    %c0_i32_0 = arith.constant 0 : i32
    %c0_i32_1 = arith.constant 0 : i32
    return %c0_i32, %c0_i32_0 : i32, i32
  }
  func.func @transform_3(%arg0: i32) -> (i32, i32) {
    %c0_i32 = arith.constant 0 : i32
    %c0_i32_0 = arith.constant 0 : i32
    %c0_i32_1 = arith.constant 0 : i32
    return %c0_i32, %c0_i32_0 : i32, i32
  }
  func.func @transform_4(%arg0: i32) -> (i32, i32) {
    %c0_i32 = arith.constant 0 : i32
    %c0_i32_0 = arith.constant 0 : i32
    %c0_i32_1 = arith.constant 0 : i32
    return %c0_i32, %c0_i32_0 : i32, i32
  }
  func.func @transform_5(%arg0: i32) -> (i32, i32) {
    %c0_i32 = arith.constant 0 : i32
    %c0_i32_0 = arith.constant 0 : i32
    %c0_i32_1 = arith.constant 0 : i32
    return %c0_i32, %c0_i32_0 : i32, i32
  }
  func.func @transform_6(%arg0: i32) -> (i32, i32) {
    %c0_i32 = arith.constant 0 : i32
    %c0_i32_0 = arith.constant 0 : i32
    %c0_i32_1 = arith.constant 0 : i32
    return %c0_i32, %c0_i32_0 : i32, i32
  }
  func.func @transform_7(%arg0: i32) -> (i32, i32) {
    %c0_i32 = arith.constant 0 : i32
    %c0_i32_0 = arith.constant 0 : i32
    %c0_i32_1 = arith.constant 0 : i32
    return %c0_i32, %c0_i32_0 : i32, i32
  }
  func.func @transform_8(%arg0: i32) -> (i32, i32) {
    %c0_i32 = arith.constant 0 : i32
    %c0_i32_0 = arith.constant 0 : i32
    return %arg0, %c0_i32 : i32, i32
  }
  func.func @transform_9(%arg0: i32) -> (i32, i32, i32) {
    %c0_i32 = arith.constant 0 : i32
    %c0_i32_0 = arith.constant 0 : i32
    %c0_i32_1 = arith.constant 0 : i32
    return %arg0, %c0_i32, %c0_i32_0 : i32, i32, i32
  }
}

</mosaic_0001>

<llo_original>
// kernel: tpu_custom_call.1
$region0: #{tpu_custom_call.1}
  #allocation0 [shape = 'u32[]', space=smem, size = 0x4, offset = 0x4, fixed_abs, tag = 'smem constant byte address 0x4 - core index']
  #allocation1 [shape = 'u32[144,128]{1,0:T(1,128)}', space=vmem, size = 0x12000, scoped, tag = 'internal scratch']
  #allocation2 [shape = 'bf16[1,16,64]{2,1,0:T(8,128)(2,1)}', space=vmem, size = 0x1000, scoped, tag = 'scratch operand']
  %s0 = inlined_call_operand.hbm [shape: f32[32,64], index: 0, kind: input, shape index: {}]
  %s1 = inlined_call_operand.vmem [shape: f32[1,64], index: 1, kind: input, shape index: {}]
  %s2 = inlined_call_operand.vmem [shape: f32[1,64], index: 2, kind: input, shape index: {}]
  %s3 = inlined_call_operand.hbm [shape: bf16[64,64], index: 3, kind: input, shape index: {}]
  %s4 = inlined_call_operand.hbm [shape: bf16[64,64], index: 4, kind: input, shape index: {}]
  %s5 = inlined_call_operand.hbm [shape: bf16[64,64], index: 5, kind: input, shape index: {}]
  %s6 = inlined_call_operand.hbm [shape: bf16[64,64], index: 6, kind: input, shape index: {}]
  %s7 = inlined_call_operand.vmem [shape: f32[1,64], index: 7, kind: input, shape index: {}]
  %s8 = inlined_call_operand.hbm [shape: f32[32,64], index: 8, kind: output, shape index: {0}]
  %s9 = inlined_call_operand.hbm [shape: f32[2,1,16], index: 9, kind: output, shape index: {1}]
  %10 = xla_tuple %s8, %s9
  %s11 = sld [smem:[#allocation0]]
  $region93: #{tpu_custom_call.1} parent=0
    _
  %s13 = ssub.s32 1, %s11
  %s14 = scalar_select 0, %s13, %s11
  $region1: #{tpu_custom_call.1} parent=0
    #allocation3 [shape = 'u8[16384]{0}', space=vmem, size = 0x4000, scoped, tag = 'input window, operand 0']
    #allocation4 [shape = 's32[2]{0}', space=sflag, size = 0x8, scoped, tag = 'scoped memory for tpu_custom_call.1']
    #allocation5 [shape = 's32[2]{0}', space=sflag, size = 0x8, scoped, tag = 'scoped memory for tpu_custom_call.1']
    #allocation6 [shape = 'u8[16384]{0}', space=vmem, size = 0x4000, scoped, tag = 'input window, operand 3, single buffered']
    #allocation7 [shape = 's32[1]{0}', space=sflag, size = 0x4, scoped, tag = 'scoped memory for tpu_custom_call.1']
    #allocation8 [shape = 'u8[16384]{0}', space=vmem, size = 0x4000, scoped, tag = 'input window, operand 4, single buffered']
    #allocation9 [shape = 'u8[16384]{0}', space=vmem, size = 0x4000, scoped, tag = 'input window, operand 5, single buffered']
    #allocation10 [shape = 's32[1]{0}', space=sflag, size = 0x4, scoped, tag = 'scoped memory for tpu_custom_call.1']
    #allocation11 [shape = 'u8[16384]{0}', space=vmem, size = 0x4000, scoped, tag = 'input window, operand 6, single buffered']
    #allocation12 [shape = 'u8[16384]{0}', space=vmem, size = 0x4000, scoped, tag = 'output window, operand 0']
    #allocation13 [shape = 'u8[1024]{0}', space=vmem, size = 0x400, scoped, tag = 'output window, operand 1']
    #allocation14 [shape = 's32[2]{0}', space=sflag, size = 0x8, scoped, tag = 'scoped memory for tpu_custom_call.1']
    %15 = vsyncpa [#allocation4], 0
    %s16 = scalar_lea.sflag [#allocation4], 1
    %17 = vsyncpa %s16, 0
    %18 = vsyncpa [#allocation7], 0
    %19 = vsyncpa [#allocation10], 0
    %20 = vsyncpa [#allocation5], 0
    %s21 = scalar_lea.sflag [#allocation5], 1
    %22 = vsyncpa %s21, 0
    %23 = vsyncpa [#allocation14], 0
    %s24 = scalar_lea.sflag [#allocation14], 1
    %25 = vsyncpa %s24, 0
    loop: start=0, step=1, limit=4
    $region2: #{tpu_custom_call.1} parent=1 // loop_pre_header
      _
    $region3: #{tpu_custom_call.1} parent=1 // loop_header
      %s27 = sphi 0, %s31
      %p28 = scmp.ge.s32.totalorder %s27, 4
      %s37 = sphi 0, %s39
      %s40 = sphi 0, %s37
      %s41 = sphi 0, %s40
      %s57 = sphi 0, %s41
      %s61 = sphi 0, %s61
      %s63 = sphi 0, %s61
      %s64 = sphi 0, %s63
      %s78 = sphi 0, %s64
      %s82 = sphi 0, %s82
      %s84 = sphi 0, %s82
      %s85 = sphi 0, %s84
      %s99 = sphi 0, %s85
      %s103 = sphi 0, %s103
      %s105 = sphi 0, %s103
      %s106 = sphi 0, %s105
      %s120 = sphi 0, %s106
      %s124 = sphi 0, %s124
      %s126 = sphi 0, %s124
      %s127 = sphi 0, %s126
      %s141 = sphi 0, %s127
      %s145 = sphi 0, %s145
      %s147 = sphi 0, %s145
      %s148 = sphi 0, %s147
      %s162 = sphi 0, %s148
      %s166 = sphi 0, %s166
      %s168 = sphi 0, %s166
      %s169 = sphi 0, %s168
      %s183 = sphi 0, %s169
      %s187 = sphi 0, %s187
      %s189 = sphi 0, %s187
      %s190 = sphi 0, %s189
      %s204 = sphi 0, %s190
      %s210 = sphi 0, %s212
      %s213 = sphi 0, %s210
      %s214 = sphi 0, %s213
      %s230 = sphi 0, %s214
      %s236 = sphi 0, %s238
      %s239 = sphi 0, %s236
      %s240 = sphi 0, %s239
      %s256 = sphi 0, %s240
    $region4: #{tpu_custom_call.1} parent=1 // loop_header_branch
      %30 = sbr.rel (%p28) target = $region8
    $region5: #{tpu_custom_call.1} parent=1 // loop_body
      %s32 = ssub.s32 %s27, 1
      %s33 = ssub.s32 %s27, 2
      %s34 = sadd.s32 %s27, 1
      %s35 = ssub.s32 %s27, %s34
      %p36 = scmp.eq.s32.totalorder %s35, 0
      %s38 = sadd.s32 %s37, 1
      %s39 = scalar_select %p36, %s37, %s38
      %p42 = pneg %p36
      %p43 = scmp.eq.s32.totalorder %s27, 1
      %p44 = por %p42, %p43
      %p45 = scmp.ne.s32.totalorder %s37, %s40
      %p46 = scmp.eq.s32.totalorder %s27, 0
      %p47 = por %p45, %p46
      %p48 = scmp.ne.s32.totalorder %s37, %s40
      %p49 = scmp.eq.s32.totalorder %s32, 1
      %p50 = por %p48, %p49
      %p51 = scmp.ne.s32.totalorder %s40, %s41
      %p52 = scmp.eq.s32.totalorder %s32, 0
      %p53 = por %p51, %p52
      %p54 = scmp.ne.s32.totalorder %s40, %s41
      %p55 = scmp.eq.s32.totalorder %s33, 1
      %p56 = por %p54, %p55
      %p58 = scmp.ne.s32.totalorder %s41, %s57
      %p59 = scmp.eq.s32.totalorder %s33, 0
      %p60 = por %p58, %p59
      %s62 = sadd.s32 %s61, 1
      %p65 = scmp.eq.s32.totalorder %s27, 1
      %p66 = scmp.ne.s32.totalorder %s61, %s63
      %p67 = scmp.eq.s32.totalorder %s27, 0
      %p68 = por %p66, %p67
      %p69 = scmp.ne.s32.totalorder %s61, %s63
      %p70 = scmp.eq.s32.totalorder %s32, 1
      %p71 = por %p69, %p70
      %p72 = scmp.ne.s32.totalorder %s63, %s64
      %p73 = scmp.eq.s32.totalorder %s32, 0
      %p74 = por %p72, %p73
      %p75 = scmp.ne.s32.totalorder %s63, %s64
      %p76 = scmp.eq.s32.totalorder %s33, 1
      %p77 = por %p75, %p76
      %p79 = scmp.ne.s32.totalorder %s64, %s78
      %p80 = scmp.eq.s32.totalorder %s33, 0
      %p81 = por %p79, %p80
      %s83 = sadd.s32 %s82, 1
      %p86 = scmp.eq.s32.totalorder %s27, 1
      %p87 = scmp.ne.s32.totalorder %s82, %s84
      %p88 = scmp.eq.s32.totalorder %s27, 0
      %p89 = por %p87, %p88
      %p90 = scmp.ne.s32.totalorder %s82, %s84
      %p91 = scmp.eq.s32.totalorder %s32, 1
      %p92 = por %p90, %p91
      %p93 = scmp.ne.s32.totalorder %s84, %s85
      %p94 = scmp.eq.s32.totalorder %s32, 0
      %p95 = por %p93, %p94
      %p96 = scmp.ne.s32.totalorder %s84, %s85
      %p97 = scmp.eq.s32.totalorder %s33, 1
      %p98 = por %p96, %p97
      %p100 = scmp.ne.s32.totalorder %s85, %s99
      %p101 = scmp.eq.s32.totalorder %s33, 0
      %p102 = por %p100, %p101
      %s104 = sadd.s32 %s103, 1
      %p107 = scmp.eq.s32.totalorder %s27, 1
      %p108 = scmp.ne.s32.totalorder %s103, %s105
      %p109 = scmp.eq.s32.totalorder %s27, 0
      %p110 = por %p108, %p109
      %p111 = scmp.ne.s32.totalorder %s103, %s105
      %p112 = scmp.eq.s32.totalorder %s32, 1
      %p113 = por %p111, %p112
      %p114 = scmp.ne.s32.totalorder %s105, %s106
      %p115 = scmp.eq.s32.totalorder %s32, 0
      %p116 = por %p114, %p115
      %p117 = scmp.ne.s32.totalorder %s105, %s106
      %p118 = scmp.eq.s32.totalorder %s33, 1
      %p119 = por %p117, %p118
      %p121 = scmp.ne.s32.totalorder %s106, %s120
      %p122 = scmp.eq.s32.totalorder %s33, 0
      %p123 = por %p121, %p122
      %s125 = sadd.s32 %s124, 1
      %p128 = scmp.eq.s32.totalorder %s27, 1
      %p129 = scmp.ne.s32.totalorder %s124, %s126
      %p130 = scmp.eq.s32.totalorder %s27, 0
      %p131 = por %p129, %p130
      %p132 = scmp.ne.s32.totalorder %s124, %s126
      %p133 = scmp.eq.s32.totalorder %s32, 1
      %p134 = por %p132, %p133
      %p135 = scmp.ne.s32.totalorder %s126, %s127
      %p136 = scmp.eq.s32.totalorder %s32, 0
      %p137 = por %p135, %p136
      %p138 = scmp.ne.s32.totalorder %s126, %s127
      %p139 = scmp.eq.s32.totalorder %s33, 1
      %p140 = por %p138, %p139
      %p142 = scmp.ne.s32.totalorder %s127, %s141
      %p143 = scmp.eq.s32.totalorder %s33, 0
      %p144 = por %p142, %p143
      %s146 = sadd.s32 %s145, 1
      %p149 = scmp.eq.s32.totalorder %s27, 1
      %p150 = scmp.ne.s32.totalorder %s145, %s147
      %p151 = scmp.eq.s32.totalorder %s27, 0
      %p152 = por %p150, %p151
      %p153 = scmp.ne.s32.totalorder %s145, %s147
      %p154 = scmp.eq.s32.totalorder %s32, 1
      %p155 = por %p153, %p154
      %p156 = scmp.ne.s32.totalorder %s147, %s148
      %p157 = scmp.eq.s32.totalorder %s32, 0
      %p158 = por %p156, %p157
      %p159 = scmp.ne.s32.totalorder %s147, %s148
      %p160 = scmp.eq.s32.totalorder %s33, 1
      %p161 = por %p159, %p160
      %p163 = scmp.ne.s32.totalorder %s148, %s162
      %p164 = scmp.eq.s32.totalorder %s33, 0
      %p165 = por %p163, %p164
      %s167 = sadd.s32 %s166, 1
      %p170 = scmp.eq.s32.totalorder %s27, 1
      %p171 = scmp.ne.s32.totalorder %s166, %s168
      %p172 = scmp.eq.s32.totalorder %s27, 0
      %p173 = por %p171, %p172
      %p174 = scmp.ne.s32.totalorder %s166, %s168
      %p175 = scmp.eq.s32.totalorder %s32, 1
      %p176 = por %p174, %p175
      %p177 = scmp.ne.s32.totalorder %s168, %s169
      %p178 = scmp.eq.s32.totalorder %s32, 0
      %p179 = por %p177, %p178
      %p180 = scmp.ne.s32.totalorder %s168, %s169
      %p181 = scmp.eq.s32.totalorder %s33, 1
      %p182 = por %p180, %p181
      %p184 = scmp.ne.s32.totalorder %s169, %s183
      %p185 = scmp.eq.s32.totalorder %s33, 0
      %p186 = por %p184, %p185
      %s188 = sadd.s32 %s187, 1
      %p191 = scmp.eq.s32.totalorder %s27, 1
      %p192 = scmp.ne.s32.totalorder %s187, %s189
      %p193 = scmp.eq.s32.totalorder %s27, 0
      %p194 = por %p192, %p193
      %p195 = scmp.ne.s32.totalorder %s187, %s189
      %p196 = scmp.eq.s32.totalorder %s32, 1
      %p197 = por %p195, %p196
      %p198 = scmp.ne.s32.totalorder %s189, %s190
      %p199 = scmp.eq.s32.totalorder %s32, 0
      %p200 = por %p198, %p199
      %p201 = scmp.ne.s32.totalorder %s189, %s190
      %p202 = scmp.eq.s32.totalorder %s33, 1
      %p203 = por %p201, %p202
      %p205 = scmp.ne.s32.totalorder %s190, %s204
      %p206 = scmp.eq.s32.totalorder %s33, 0
      %p207 = por %p205, %p206
      %s208 = ssub.s32 %s27, %s34
      %p209 = scmp.eq.s32.totalorder %s208, 0
      %s211 = sadd.s32 %s210, 1
      %s212 = scalar_select %p209, %s210, %s211
      %p215 = pneg %p209
      %p216 = scmp.eq.s32.totalorder %s27, 1
      %p217 = por %p215, %p216
      %p218 = scmp.ne.s32.totalorder %s210, %s213
      %p219 = scmp.eq.s32.totalorder %s27, 0
      %p220 = por %p218, %p219
      %p221 = scmp.ne.s32.totalorder %s210, %s213
      %p222 = scmp.eq.s32.totalorder %s32, 1
      %p223 = por %p221, %p222
      %p224 = scmp.ne.s32.totalorder %s213, %s214
      %p225 = scmp.eq.s32.totalorder %s32, 0
      %p226 = por %p224, %p225
      %p227 = scmp.ne.s32.totalorder %s213, %s214
      %p228 = scmp.eq.s32.totalorder %s33, 1
      %p229 = por %p227, %p228
      %p231 = scmp.ne.s32.totalorder %s214, %s230
      %p232 = scmp.eq.s32.totalorder %s33, 0
      %p233 = por %p231, %p232
      %s234 = ssub.s32 %s27, %s34
      %p235 = scmp.eq.s32.totalorder %s234, 0
      %s237 = sadd.s32 %s236, 1
      %s238 = scalar_select %p235, %s236, %s237
      %p241 = pneg %p235
      %p242 = scmp.eq.s32.totalorder %s27, 1
      %p243 = por %p241, %p242
      %p244 = scmp.ne.s32.totalorder %s236, %s239
      %p245 = scmp.eq.s32.totalorder %s27, 0
      %p246 = por %p244, %p245
      %p247 = scmp.ne.s32.totalorder %s236, %s239
      %p248 = scmp.eq.s32.totalorder %s32, 1
      %p249 = por %p247, %p248
      %p250 = scmp.ne.s32.totalorder %s239, %s240
      %p251 = scmp.eq.s32.totalorder %s32, 0
      %p252 = por %p250, %p251
      %p253 = scmp.ne.s32.totalorder %s239, %s240
      %p254 = scmp.eq.s32.totalorder %s33, 1
      %p255 = por %p253, %p254
      %p257 = scmp.ne.s32.totalorder %s240, %s256
      %p258 = scmp.eq.s32.totalorder %s33, 0
      %p259 = por %p257, %p258
      %p260 = scmp.le.s32.totalorder 1, %s27
      %p261 = scmp.lt.s32.totalorder %s27, 3
      %p262 = pnand %p260, %p261
      %p263 = pneg %p262
      // Predicated region
      $region9: #{tpu_custom_call.1} parent=5 // pred_check
        _
      $region10: #{tpu_custom_call.1} parent=5 // pred_check_branch
        %265 = sbr.rel (%p262) target = $region12
      $region11: #{tpu_custom_call.1} parent=5 // pred_region
        %s266 = ssub.s32 %s27, 1
        // Predicated region
        $region13: #{tpu_custom_call.1} parent=11 // pred_check
          %p267 = pneg %p74
        $region14: #{tpu_custom_call.1} parent=11 // pred_check_branch
          %269 = sbr.rel (%p267) target = $region16
        $region15: #{tpu_custom_call.1} parent=11 // pred_region
          _
        $region16: #{tpu_custom_call.1} parent=11 // pred_fallthru
          _
        // Predicated region
        $region17: #{tpu_custom_call.1} parent=11 // pred_check
          %p270 = pneg %p95
        $region18: #{tpu_custom_call.1} parent=11 // pred_check_branch
          %272 = sbr.rel (%p270) target = $region20
        $region19: #{tpu_custom_call.1} parent=11 // pred_region
          _
        $region20: #{tpu_custom_call.1} parent=11 // pred_fallthru
          _
        // Predicated region
        $region21: #{tpu_custom_call.1} parent=11 // pred_check
          %p273 = pneg %p116
        $region22: #{tpu_custom_call.1} parent=11 // pred_check_branch
          %275 = sbr.rel (%p273) target = $region24
        $region23: #{tpu_custom_call.1} parent=11 // pred_region
          %s277 = ssub.s32 512, 512
          %278 = vsyncadd [#allocation7], %s277
          %s279 = sshll.u32 [#allocation6], 4
          %s280 = int_to_ptr.vmem [resolvable:$true] %s279
          %285 = dma.hbm_to_vmem [thread:$0]  %s3, 512, %s280, [#allocation7], 64, 64, 4
        $region24: #{tpu_custom_call.1} parent=11 // pred_fallthru
          _
        // Predicated region
        $region25: #{tpu_custom_call.1} parent=11 // pred_check
          %p286 = pneg %p137
        $region26: #{tpu_custom_call.1} parent=11 // pred_check_branch
          %288 = sbr.rel (%p286) target = $region28
        $region27: #{tpu_custom_call.1} parent=11 // pred_region
          %s290 = ssub.s32 512, 512
          %291 = vsyncadd [#allocation7], %s290
          %s292 = sshll.u32 [#allocation8], 4
          %s293 = int_to_ptr.vmem [resolvable:$true] %s292
          %298 = dma.hbm_to_vmem [thread:$0]  %s4, 512, %s293, [#allocation7], 64, 64, 4
        $region28: #{tpu_custom_call.1} parent=11 // pred_fallthru
          _
        // Predicated region
        $region29: #{tpu_custom_call.1} parent=11 // pred_check
          %p299 = pneg %p158
        $region30: #{tpu_custom_call.1} parent=11 // pred_check_branch
          %301 = sbr.rel (%p299) target = $region32
        $region31: #{tpu_custom_call.1} parent=11 // pred_region
          %s303 = ssub.s32 512, 512
          %304 = vsyncadd [#allocation10], %s303
          %s305 = sshll.u32 [#allocation9], 4
          %s306 = int_to_ptr.vmem [resolvable:$true] %s305
          %311 = dma.hbm_to_vmem [thread:$0]  %s5, 512, %s306, [#allocation10], 64, 64, 4
        $region32: #{tpu_custom_call.1} parent=11 // pred_fallthru
          _
        // Predicated region
        $region33: #{tpu_custom_call.1} parent=11 // pred_check
          %p312 = pneg %p179
        $region34: #{tpu_custom_call.1} parent=11 // pred_check_branch
          %314 = sbr.rel (%p312) target = $region36
        $region35: #{tpu_custom_call.1} parent=11 // pred_region
          %s316 = ssub.s32 512, 512
          %317 = vsyncadd [#allocation10], %s316
          %s318 = sshll.u32 [#allocation11], 4
          %s319 = int_to_ptr.vmem [resolvable:$true] %s318
          %324 = dma.hbm_to_vmem [thread:$0]  %s6, 512, %s319, [#allocation10], 64, 64, 4
        $region36: #{tpu_custom_call.1} parent=11 // pred_fallthru
          _
        // Predicated region
        $region37: #{tpu_custom_call.1} parent=11 // pred_check
          %p325 = pneg %p200
        $region38: #{tpu_custom_call.1} parent=11 // pred_check_branch
          %327 = sbr.rel (%p325) target = $region40
        $region39: #{tpu_custom_call.1} parent=11 // pred_region
          _
        $region40: #{tpu_custom_call.1} parent=11 // pred_fallthru
          _
      $region12: #{tpu_custom_call.1} parent=5 // pred_fallthru
        _
      %p328 = scmp.lt.s32.totalorder %s27, 2
      // Predicated region
      $region41: #{tpu_custom_call.1} parent=5 // pred_check
        %p329 = pneg %p328
      $region42: #{tpu_custom_call.1} parent=5 // pred_check_branch
        %331 = sbr.rel (%p329) target = $region44
      $region43: #{tpu_custom_call.1} parent=5 // pred_region
        // Predicated region
        $region45: #{tpu_custom_call.1} parent=43 // pred_check
          %p332 = pneg %p47
        $region46: #{tpu_custom_call.1} parent=43 // pred_check_branch
          %334 = sbr.rel (%p332) target = $region48
        $region47: #{tpu_custom_call.1} parent=43 // pred_region
          %s335 = sand.u32 %s37, 1
          %s336 = scalar_lea.sflag [#allocation4], %s335
          %s337 = sand.u32 %s37, 1
          %s338 = smul.addr %s337, 16
          %s339 = scalar_lea.vmem [#allocation3], %s338
          %s340 = smul.u32 2, %s27
          %s342 = ssub.s32 256, 256
          %343 = vsyncadd %s336, %s342
          %s344 = smul.addr %s340, 128
          %s345 = scalar_lea.hbm %s0, %s344
          %s346 = sshll.u32 %s339, 4
          %s347 = int_to_ptr.vmem [resolvable:$true] %s346
          %352 = dma.hbm_to_vmem [thread:$0]  %s345, 256, %s347, %s336, 128, 128, 8
        $region48: #{tpu_custom_call.1} parent=43 // pred_fallthru
          _
      $region44: #{tpu_custom_call.1} parent=5 // pred_fallthru
        _
      %p353 = scmp.le.s32.totalorder 1, %s27
      %p354 = scmp.lt.s32.totalorder %s27, 3
      %p355 = pnand %p353, %p354
      %p356 = pneg %p355
      // Predicated region
      $region49: #{tpu_custom_call.1} parent=5 // pred_check
        _
      $region50: #{tpu_custom_call.1} parent=5 // pred_check_branch
        %358 = sbr.rel (%p355) target = $region52
      $region51: #{tpu_custom_call.1} parent=5 // pred_region
        %s359 = ssub.s32 %s27, 1
        %s360 = sand.u32 %s40, 1
        %s361 = scalar_lea.sflag [#allocation4], %s360
        %s362 = sand.u32 %s40, 1
        %s363 = smul.addr %s362, 16
        %s364 = scalar_lea.vmem [#allocation3], %s363
        // Predicated region
        $region53: #{tpu_custom_call.1} parent=51 // pred_check
          %p365 = pneg %p53
        $region54: #{tpu_custom_call.1} parent=51 // pred_check_branch
          %367 = sbr.rel (%p365) target = $region56
        $region55: #{tpu_custom_call.1} parent=51 // pred_region
          %368 = dma.done %s361, 256
        $region56: #{tpu_custom_call.1} parent=51 // pred_fallthru
          _
        // Predicated region
        $region57: #{tpu_custom_call.1} parent=51 // pred_check
          %p369 = pneg %p116
        $region58: #{tpu_custom_call.1} parent=51 // pred_check_branch
          %371 = sbr.rel (%p369) target = $region60
        $region59: #{tpu_custom_call.1} parent=51 // pred_region
          %372 = dma.done [#allocation7], 512
        $region60: #{tpu_custom_call.1} parent=51 // pred_fallthru
          _
        // Predicated region
        $region61: #{tpu_custom_call.1} parent=51 // pred_check
          %p373 = pneg %p137
        $region62: #{tpu_custom_call.1} parent=51 // pred_check_branch
          %375 = sbr.rel (%p373) target = $region64
        $region63: #{tpu_custom_call.1} parent=51 // pred_region
          %376 = dma.done [#allocation7], 512
        $region64: #{tpu_custom_call.1} parent=51 // pred_fallthru
          _
        // Predicated region
        $region65: #{tpu_custom_call.1} parent=51 // pred_check
          %p377 = pneg %p158
        $region66: #{tpu_custom_call.1} parent=51 // pred_check_branch
          %379 = sbr.rel (%p377) target = $region68
        $region67: #{tpu_custom_call.1} parent=51 // pred_region
          %380 = dma.done [#allocation10], 512
        $region68: #{tpu_custom_call.1} parent=51 // pred_fallthru
          _
        // Predicated region
        $region69: #{tpu_custom_call.1} parent=51 // pred_check
          %p381 = pneg %p179
        $region70: #{tpu_custom_call.1} parent=51 // pred_check_branch
          %383 = sbr.rel (%p381) target = $region72
        $region71: #{tpu_custom_call.1} parent=51 // pred_region
          %384 = dma.done [#allocation10], 512
        $region72: #{tpu_custom_call.1} parent=51 // pred_fallthru
          _
        %s385 = sand.u32 %s40, 1
        %s386 = scalar_lea.sflag [#allocation4], %s385
        %s387 = sand.u32 %s40, 1
        %s388 = smul.addr %s387, 16
        %s389 = scalar_lea.vmem [#allocation3], %s388
        %p390 = pneg %p53
        %p391 = pneg %p50
        %p392 = pneg %p74
        %p393 = pneg %p71
        %p394 = pneg %p95
        %p395 = pneg %p92
        %p396 = pneg %p116
        %p397 = pneg %p113
        %p398 = pneg %p137
        %p399 = pneg %p134
        %p400 = pneg %p158
        %p401 = pneg %p155
        %p402 = pneg %p179
        %p403 = pneg %p176
        %p404 = pneg %p200
        %p405 = pneg %p197
        %p406 = pneg %p226
        %p407 = pneg %p223
        %s408 = sand.u32 %s213, 1
        %s409 = scalar_lea.sflag [#allocation5], %s408
        %s410 = sand.u32 %s213, 1
        %s411 = smul.addr %s410, 16
        %s412 = scalar_lea.vmem [#allocation12], %s411
        %p413 = pneg %p252
        %p414 = pneg %p249
        %s415 = sand.u32 %s239, 1
        %s416 = scalar_lea.sflag [#allocation14], %s415
        %s417 = sand.u32 %s239, 1
        %s418 = scalar_lea.vmem [#allocation13], %s417
        %s419 = smul.u32 2, %s32
        %s420 = smul.u32 2, %s32
        %v422 = vld [vmem:[%s364] sm:$0xff]
        %v423 = vld [vmem:[%s364 + $0x8] sm:$0xff]
        %v424 = vld [vmem:[%s1] sm:$0x1]
        %v425 = vld [vmem:[%s2] sm:$0x1]
        %vm426 = vcmask 523264
        %v427 = vsel %vm426, %v422, 0.0
        %428 = vadd.xlane.f32.xlu0 %v427
        %v429 = vpop.xlane.xlu0 %428
        %v430 = vsel %vm426, %v423, 0.0
        %431 = vadd.xlane.f32.xlu0 %v430
        %v432 = vpop.xlane.xlu0 %431
        %v433 = vrcp.pop 64.0
        %v434 = vmul.f32 %v429, %v433
        %v435 = vmul.f32 %v432, %v433
        %v436 = vsub.f32 %v422, %v434
        %v437 = vsub.f32 %v423, %v435
        %v438 = vmul.f32 %v436, %v436
        %v439 = vmul.f32 %v437, %v437
        %v440 = vsel %vm426, %v438, 0.0
        %441 = vadd.xlane.f32.xlu0 %v440
        %v442 = vpop.xlane.xlu0 %441
        %v443 = vsel %vm426, %v439, 0.0
        %444 = vadd.xlane.f32.xlu0 %v443
        %v445 = vpop.xlane.xlu0 %444
        %v446 = vmul.f32 %v442, %v433
        %v447 = vmul.f32 %v445, %v433
        %v448 = vadd.f32 %v446, 1e-05
        %v449 = vadd.f32 %v447, 1e-05
        %v450 = vrsqrt.pop %v448
        %v451 = vrsqrt.pop %v449
        %v452 = vmul.f32 %v436, %v450
        %v453 = vmul.f32 %v437, %v451
        %v455 = vlaneseq
        %v456 = vshrl.u32 %v455, 7
        %v457 = vsub.s32 0, %v456
        %v458 = vrot.slane %v424, %v457
        %v460 = vmul.f32 %v452, %v458
        %v461 = vmul.f32 %v453, %v458
        %v463 = vlaneseq
        %v464 = vshrl.u32 %v463, 7
        %v465 = vsub.s32 0, %v464
        %v466 = vrot.slane %v425, %v465
        %v468 = vadd.f32 %v460, %v466
        %v469 = vadd.f32 %v461, %v466
        %v470 = vpack.c.bf16 %v469, %v468
        %v471 = vld [vmem:[#allocation6] sm:$0xf]
        %v472 = vld [vmem:[#allocation6 + $0x4] sm:$0xf]
        %v473 = vld [vmem:[#allocation6 + $0x8] sm:$0xf]
        %v474 = vld [vmem:[#allocation6 + $0xc] sm:$0xf]
        %v475 = vld [vmem:[#allocation6 + $0x10] sm:$0xf]
        %v476 = vld [vmem:[#allocation6 + $0x14] sm:$0xf]
        %v477 = vld [vmem:[#allocation6 + $0x18] sm:$0xf]
        %v478 = vld [vmem:[#allocation6 + $0x1c] sm:$0xf]
        %v487 = vunpack.c.l.b16 %v471
        %v488 = vunpack.c.l.b16 %v472
        %v489 = vunpack.c.l.b16 %v473
        %v490 = vunpack.c.l.b16 %v474
        %v491 = vunpack.c.l.b16 %v475
        %v492 = vunpack.c.l.b16 %v476
        %v493 = vunpack.c.l.b16 %v477
        %v494 = vunpack.c.l.b16 %v478
        %v495 = vpack.c.b16 %v488, %v487
        %v496 = vpack.c.b16 %v490, %v489
        %v497 = vpack.c.b16 %v492, %v491
        %v498 = vpack.c.b16 %v494, %v493
        %v504 = vsel %vm426, %v470, 0
        %506 = vmatprep.subr.bf16.mxu0 0
        %507 = vmatpush1.bf16.msra.mxu0 0
        %508 = vmatprep.subr.bf16.mxu0 0
        %509 = vmatpush1.bf16.msra.mxu0 0
        %510 = vmatprep.subr.bf16.mxu0 0
        %511 = vmatpush1.bf16.msra.mxu0 0
        %512 = vmatprep.subr.bf16.mxu0 0
        %513 = vmatpush1.bf16.msra.mxu0 0
        %514 = vmatprep.subr.bf16.mxu0 0
        %515 = vmatpush1.bf16.msra.mxu0 %v498
        %516 = vmatprep.subr.bf16.mxu0 0
        %517 = vmatpush1.bf16.msra.mxu0 %v497
        %518 = vmatprep.subr.bf16.mxu0 0
        %519 = vmatpush1.bf16.msra.mxu0 %v496
        %520 = vmatprep.subr.bf16.mxu0 0
        %521 = vmatpush1.bf16.msra.mxu0 %v495
        %522 = vmatprep.subr.bf16.mxu0 0
        %523 = vmatpush2.bf16.msra.mxu0 0
        %524 = vmatprep.subr.bf16.mxu0 0
        %525 = vmatpush2.bf16.msra.mxu0 0
        %526 = vmatprep.subr.bf16.mxu0 0
        %527 = vmatpush2.bf16.msra.mxu0 0
        %528 = vmatprep.subr.bf16.mxu0 0
        %529 = vmatpush2.bf16.msra.mxu0 0
        %530 = vmatprep.subr.bf16.mxu0 0
        %531 = vmatpush2.bf16.msra.mxu0 0
        %532 = vmatprep.subr.bf16.mxu0 0
        %533 = vmatpush2.bf16.msra.mxu0 0
        %534 = vmatprep.subr.bf16.mxu0 0
        %535 = vmatpush2.bf16.msra.mxu0 0
        %536 = vmatprep.subr.bf16.mxu0 0
        %537 = vmatpush2.bf16.msra.mxu0 0
        %538 = vmatprep.mubr.bf16.mxu0 0
        %539 = vmatmul.mubr.bf16.gmra.mxu0 %v504
        %v540 = vpop.f32.mrf.mxu0
        %v541 = vadd.f32 0.0, %v540
        %v542 = vpop.f32.mrf.mxu0
        %v543 = vpop.f32.mrf.mxu0
        %v544 = vadd.f32 0.0, %v543
        %v545 = vpop.f32.mrf.mxu0
        %546 = vdwg.mxu0
        %v547 = vmul.f32 %v541, 0.25
        %v548 = vmul.f32 %v544, 0.25
        %v549 = vpack.c.bf16 %v548, %v547
        %v550 = vld [vmem:[#allocation8] sm:$0xf]
        %v551 = vld [vmem:[#allocation8 + $0x4] sm:$0xf]
        %v552 = vld [vmem:[#allocation8 + $0x8] sm:$0xf]
        %v553 = vld [vmem:[#allocation8 + $0xc] sm:$0xf]
        %v554 = vld [vmem:[#allocation8 + $0x10] sm:$0xf]
        %v555 = vld [vmem:[#allocation8 + $0x14] sm:$0xf]
        %v556 = vld [vmem:[#allocation8 + $0x18] sm:$0xf]
        %v557 = vld [vmem:[#allocation8 + $0x1c] sm:$0xf]
        %v566 = vunpack.c.l.b16 %v550
        %v567 = vunpack.c.l.b16 %v551
        %v568 = vunpack.c.l.b16 %v552
        %v569 = vunpack.c.l.b16 %v553
        %v570 = vunpack.c.l.b16 %v554
        %v571 = vunpack.c.l.b16 %v555
        %v572 = vunpack.c.l.b16 %v556
        %v573 = vunpack.c.l.b16 %v557
        %v574 = vpack.c.b16 %v567, %v566
        %v575 = vpack.c.b16 %v569, %v568
        %v576 = vpack.c.b16 %v571, %v570
        %v577 = vpack.c.b16 %v573, %v572
        %582 = vmatprep.subr.bf16.mxu0 0
        %583 = vmatpush1.bf16.msra.mxu0 0
        %584 = vmatprep.subr.bf16.mxu0 0
        %585 = vmatpush1.bf16.msra.mxu0 0
        %586 = vmatprep.subr.bf16.mxu0 0
        %587 = vmatpush1.bf16.msra.mxu0 0
        %588 = vmatprep.subr.bf16.mxu0 0
        %589 = vmatpush1.bf16.msra.mxu0 0
        %590 = vmatprep.subr.bf16.mxu0 0
        %591 = vmatpush1.bf16.msra.mxu0 %v577
        %592 = vmatprep.subr.bf16.mxu0 0
        %593 = vmatpush1.bf16.msra.mxu0 %v576
        %594 = vmatprep.subr.bf16.mxu0 0
        %595 = vmatpush1.bf16.msra.mxu0 %v575
        %596 = vmatprep.subr.bf16.mxu0 0
        %597 = vmatpush1.bf16.msra.mxu0 %v574
        %598 = vmatprep.subr.bf16.mxu0 0
        %599 = vmatpush2.bf16.msra.mxu0 0
        %600 = vmatprep.subr.bf16.mxu0 0
        %601 = vmatpush2.bf16.msra.mxu0 0
        %602 = vmatprep.subr.bf16.mxu0 0
        %603 = vmatpush2.bf16.msra.mxu0 0
        %604 = vmatprep.subr.bf16.mxu0 0
        %605 = vmatpush2.bf16.msra.mxu0 0
        %606 = vmatprep.subr.bf16.mxu0 0
        %607 = vmatpush2.bf16.msra.mxu0 0
        %608 = vmatprep.subr.bf16.mxu0 0
        %609 = vmatpush2.bf16.msra.mxu0 0
        %610 = vmatprep.subr.bf16.mxu0 0
        %611 = vmatpush2.bf16.msra.mxu0 0
        %612 = vmatprep.subr.bf16.mxu0 0
        %613 = vmatpush2.bf16.msra.mxu0 0
        %614 = vmatprep.mubr.bf16.mxu0 0
        %615 = vmatmul.mubr.bf16.gmra.mxu0 %v504
        %v616 = vpop.f32.mrf.mxu0
        %v617 = vadd.f32 0.0, %v616
        %v618 = vpop.f32.mrf.mxu0
        %v619 = vpop.f32.mrf.mxu0
        %v620 = vadd.f32 0.0, %v619
        %v621 = vpop.f32.mrf.mxu0
        %622 = vdwg.mxu0
        %v623 = vpack.c.bf16 %v620, %v617
        %v624 = vld [vmem:[#allocation9] sm:$0xf]
        %v625 = vld [vmem:[#allocation9 + $0x4] sm:$0xf]
        %v626 = vld [vmem:[#allocation9 + $0x8] sm:$0xf]
        %v627 = vld [vmem:[#allocation9 + $0xc] sm:$0xf]
        %v628 = vld [vmem:[#allocation9 + $0x10] sm:$0xf]
        %v629 = vld [vmem:[#allocation9 + $0x14] sm:$0xf]
        %v630 = vld [vmem:[#allocation9 + $0x18] sm:$0xf]
        %v631 = vld [vmem:[#allocation9 + $0x1c] sm:$0xf]
        %v640 = vunpack.c.l.b16 %v624
        %v641 = vunpack.c.l.b16 %v625
        %v642 = vunpack.c.l.b16 %v626
        %v643 = vunpack.c.l.b16 %v627
        %v644 = vunpack.c.l.b16 %v628
        %v645 = vunpack.c.l.b16 %v629
        %v646 = vunpack.c.l.b16 %v630
        %v647 = vunpack.c.l.b16 %v631
        %v648 = vpack.c.b16 %v641, %v640
        %v649 = vpack.c.b16 %v643, %v642
        %v650 = vpack.c.b16 %v645, %v644
        %v651 = vpack.c.b16 %v647, %v646
        %656 = vmatprep.subr.bf16.mxu0 0
        %657 = vmatpush1.bf16.msra.mxu0 0
        %658 = vmatprep.subr.bf16.mxu0 0
        %659 = vmatpush1.bf16.msra.mxu0 0
        %660 = vmatprep.subr.bf16.mxu0 0
        %661 = vmatpush1.bf16.msra.mxu0 0
        %662 = vmatprep.subr.bf16.mxu0 0
        %663 = vmatpush1.bf16.msra.mxu0 0
        %664 = vmatprep.subr.bf16.mxu0 0
        %665 = vmatpush1.bf16.msra.mxu0 %v651
        %666 = vmatprep.subr.bf16.mxu0 0
        %667 = vmatpush1.bf16.msra.mxu0 %v650
        %668 = vmatprep.subr.bf16.mxu0 0
        %669 = vmatpush1.bf16.msra.mxu0 %v649
        %670 = vmatprep.subr.bf16.mxu0 0
        %671 = vmatpush1.bf16.msra.mxu0 %v648
        %672 = vmatprep.subr.bf16.mxu0 0
        %673 = vmatpush2.bf16.msra.mxu0 0
        %674 = vmatprep.subr.bf16.mxu0 0
        %675 = vmatpush2.bf16.msra.mxu0 0
        %676 = vmatprep.subr.bf16.mxu0 0
        %677 = vmatpush2.bf16.msra.mxu0 0
        %678 = vmatprep.subr.bf16.mxu0 0
        %679 = vmatpush2.bf16.msra.mxu0 0
        %680 = vmatprep.subr.bf16.mxu0 0
        %681 = vmatpush2.bf16.msra.mxu0 0
        %682 = vmatprep.subr.bf16.mxu0 0
        %683 = vmatpush2.bf16.msra.mxu0 0
        %684 = vmatprep.subr.bf16.mxu0 0
        %685 = vmatpush2.bf16.msra.mxu0 0
        %686 = vmatprep.subr.bf16.mxu0 0
        %687 = vmatpush2.bf16.msra.mxu0 0
        %688 = vmatprep.mubr.bf16.mxu0 0
        %689 = vmatmul.mubr.bf16.gmra.mxu0 %v504
        %v690 = vpop.f32.mrf.mxu0
        %v691 = vadd.f32 0.0, %v690
        %v692 = vpop.f32.mrf.mxu0
        %v693 = vpop.f32.mrf.mxu0
        %v694 = vadd.f32 0.0, %v693
        %v695 = vpop.f32.mrf.mxu0
        %696 = vdwg.mxu0
        %v697 = vpack.c.bf16 %v694, %v691
        %vm698 = vcmask 130048
        %v700 = vsel %vm698, %v549, 0
        %v703 = vsel %vm698, %v623, 0
        %705 = vmatprep.subr.bf16.mxu0 0
        %706 = vmatpush1.bf16.xpose.msra.mxu0 0
        %707 = vmatprep.subr.bf16.mxu0 0
        %708 = vmatpush1.bf16.xpose.msra.mxu0 0
        %709 = vmatprep.subr.bf16.mxu0 0
        %710 = vmatpush1.bf16.xpose.msra.mxu0 0
        %711 = vmatprep.subr.bf16.mxu0 0
        %712 = vmatpush1.bf16.xpose.msra.mxu0 0
        %713 = vmatprep.subr.bf16.mxu0 0
        %714 = vmatpush1.bf16.xpose.msra.mxu0 0
        %715 = vmatprep.subr.bf16.mxu0 0
        %716 = vmatpush1.bf16.xpose.msra.mxu0 0
        %717 = vmatprep.subr.bf16.mxu0 0
        %718 = vmatpush1.bf16.xpose.msra.mxu0 0
        %719 = vmatprep.subr.bf16.mxu0 0
        %720 = vmatpush1.bf16.xpose.msra.mxu0 %v703
        %721 = vmatprep.subr.bf16.mxu0 0
        %722 = vmatpush2.bf16.xpose.msra.mxu0 0
        %723 = vmatprep.subr.bf16.mxu0 0
        %724 = vmatpush2.bf16.xpose.msra.mxu0 0
        %725 = vmatprep.subr.bf16.mxu0 0
        %726 = vmatpush2.bf16.xpose.msra.mxu0 0
        %727 = vmatprep.subr.bf16.mxu0 0
        %728 = vmatpush2.bf16.xpose.msra.mxu0 0
        %729 = vmatprep.subr.bf16.mxu0 0
        %730 = vmatpush2.bf16.xpose.msra.mxu0 0
        %731 = vmatprep.subr.bf16.mxu0 0
        %732 = vmatpush2.bf16.xpose.msra.mxu0 0
        %733 = vmatprep.subr.bf16.mxu0 0
        %734 = vmatpush2.bf16.xpose.msra.mxu0 0
        %735 = vmatprep.subr.bf16.mxu0 0
        %736 = vmatpush2.bf16.xpose.msra.mxu0 0
        %737 = vmatprep.mubr.bf16.mxu0 0
        %738 = vmatmul.mubr.bf16.gmra.mxu0 %v700
        %v739 = vpop.f32.mrf.mxu0
        %v740 = vadd.f32 0.0, %v739
        %v741 = vpop.f32.mrf.mxu0
        %v742 = vpop.f32.mrf.mxu0
        %v743 = vadd.f32 0.0, %v742
        %v744 = vpop.f32.mrf.mxu0
        %745 = vdwg.mxu0
        %v746 = vsel %vm698, %v740, -inf
        %747 = vmax.xlane.f32.xlu0 %v746
        %v748 = vpop.xlane.xlu0 %747
        %v749 = vsel %vm698, %v743, -inf
        %750 = vmax.xlane.f32.xlu0 %v749
        %v751 = vpop.xlane.xlu0 %750
        %v752 = vsub.f32 %v740, %v748
        %v753 = vsub.f32 %v743, %v751
        %v754 = vmul.f32 %v752, 1.442695
        %v755 = vpow.pop %v754
        %v756 = vmul.f32 %v753, 1.442695
        %v757 = vpow.pop %v756
        %v758 = vsel %vm698, %v755, 0.0
        %759 = vadd.xlane.f32.xlu0 %v758
        %v760 = vpop.xlane.xlu0 %759
        %v761 = vsel %vm698, %v757, 0.0
        %762 = vadd.xlane.f32.xlu0 %v761
        %v763 = vpop.xlane.xlu0 %762
        %v764 = vrcp.pop %v760
        %v765 = vrcp.pop %v763
        %v766 = vmul.f32 %v755, %v764
        %v767 = vmul.f32 %v757, %v765
        %v768 = vrcp.pop %v760
        %v769 = vmul.f32 %v755, %v768
        %v770 = vadd.f32 %v769, 0.0
        %v771 = vpack.c.bf16 %v767, %v766
        %v773 = vsel %vm698, %v771, 0
        %775 = vmatprep.subr.bf16.mxu0 0
        %776 = vmatpush1.bf16.msra.mxu0 0
        %777 = vmatprep.subr.bf16.mxu0 0
        %778 = vmatpush1.bf16.msra.mxu0 0
        %779 = vmatprep.subr.bf16.mxu0 0
        %780 = vmatpush1.bf16.msra.mxu0 0
        %781 = vmatprep.subr.bf16.mxu0 0
        %782 = vmatpush1.bf16.msra.mxu0 0
        %783 = vmatprep.subr.bf16.mxu0 0
        %784 = vmatpush1.bf16.msra.mxu0 0
        %785 = vmatprep.subr.bf16.mxu0 0
        %786 = vmatpush1.bf16.msra.mxu0 0
        %787 = vmatprep.subr.bf16.mxu0 0
        %788 = vmatpush1.bf16.msra.mxu0 0
        %789 = vmatprep.subr.bf16.mxu0 0
        %790 = vmatpush1.bf16.msra.mxu0 %v697
        %791 = vmatprep.subr.bf16.mxu0 0
        %792 = vmatpush2.bf16.msra.mxu0 0
        %793 = vmatprep.subr.bf16.mxu0 0
        %794 = vmatpush2.bf16.msra.mxu0 0
        %795 = vmatprep.subr.bf16.mxu0 0
        %796 = vmatpush2.bf16.msra.mxu0 0
        %797 = vmatprep.subr.bf16.mxu0 0
        %798 = vmatpush2.bf16.msra.mxu0 0
        %799 = vmatprep.subr.bf16.mxu0 0
        %800 = vmatpush2.bf16.msra.mxu0 0
        %801 = vmatprep.subr.bf16.mxu0 0
        %802 = vmatpush2.bf16.msra.mxu0 0
        %803 = vmatprep.subr.bf16.mxu0 0
        %804 = vmatpush2.bf16.msra.mxu0 0
        %805 = vmatprep.subr.bf16.mxu0 0
        %806 = vmatpush2.bf16.msra.mxu0 0
        %807 = vmatprep.mubr.bf16.mxu0 0
        %808 = vmatmul.mubr.bf16.gmra.mxu0 %v773
        %v809 = vpop.f32.mrf.mxu0
        %v810 = vadd.f32 0.0, %v809
        %v811 = vpop.f32.mrf.mxu0
        %v812 = vpop.f32.mrf.mxu0
        %v813 = vadd.f32 0.0, %v812
        %v814 = vpop.f32.mrf.mxu0
        %815 = vdwg.mxu0
        %v816 = vpack.c.bf16 %v813, %v810
        %v818 = vunpack.c.l.b16 %v816
        %v819 = vunpack.c.h.b16 %v816
        %v820 = vpack.c.b16 %v818, %v818
        %v821 = vpack.c.b16 %v819, %v819
        %vm824 = vcmask 125952
        %825 = vst.msk [vmem:[#allocation2] sm:$0xf] %vm824, %v820
        %826 = vst.msk [vmem:[#allocation2 + $0x4] sm:$0xf] %vm824, %v821
        %828 = vrot.lane.b32.xlu0 %v549, 112
        %v829 = vpop.permute.xlu0 %828
        %831 = vrot.lane.b32.xlu0 %v623, 112
        %v832 = vpop.permute.xlu0 %831
        %v834 = vsel %vm698, %v829, 0
        %v837 = vsel %vm698, %v832, 0
        %839 = vmatprep.subr.bf16.mxu0 0
        %840 = vmatpush1.bf16.xpose.msra.mxu0 0
        %841 = vmatprep.subr.bf16.mxu0 0
        %842 = vmatpush1.bf16.xpose.msra.mxu0 0
        %843 = vmatprep.subr.bf16.mxu0 0
        %844 = vmatpush1.bf16.xpose.msra.mxu0 0
        %845 = vmatprep.subr.bf16.mxu0 0
        %846 = vmatpush1.bf16.xpose.msra.mxu0 0
        %847 = vmatprep.subr.bf16.mxu0 0
        %848 = vmatpush1.bf16.xpose.msra.mxu0 0
        %849 = vmatprep.subr.bf16.mxu0 0
        %850 = vmatpush1.bf16.xpose.msra.mxu0 0
        %851 = vmatprep.subr.bf16.mxu0 0
        %852 = vmatpush1.bf16.xpose.msra.mxu0 0
        %853 = vmatprep.subr.bf16.mxu0 0
        %854 = vmatpush1.bf16.xpose.msra.mxu0 %v837
        %855 = vmatprep.subr.bf16.mxu0 0
        %856 = vmatpush2.bf16.xpose.msra.mxu0 0
        %857 = vmatprep.subr.bf16.mxu0 0
        %858 = vmatpush2.bf16.xpose.msra.mxu0 0
        %859 = vmatprep.subr.bf16.mxu0 0
        %860 = vmatpush2.bf16.xpose.msra.mxu0 0
        %861 = vmatprep.subr.bf16.mxu0 0
        %862 = vmatpush2.bf16.xpose.msra.mxu0 0
        %863 = vmatprep.subr.bf16.mxu0 0
        %864 = vmatpush2.bf16.xpose.msra.mxu0 0
        %865 = vmatprep.subr.bf16.mxu0 0
        %866 = vmatpush2.bf16.xpose.msra.mxu0 0
        %867 = vmatprep.subr.bf16.mxu0 0
        %868 = vmatpush2.bf16.xpose.msra.mxu0 0
        %869 = vmatprep.subr.bf16.mxu0 0
        %870 = vmatpush2.bf16.xpose.msra.mxu0 0
        %871 = vmatprep.mubr.bf16.mxu0 0
        %872 = vmatmul.mubr.bf16.gmra.mxu0 %v834
        %v873 = vpop.f32.mrf.mxu0
        %v874 = vadd.f32 0.0, %v873
        %v875 = vpop.f32.mrf.mxu0
        %v876 = vpop.f32.mrf.mxu0
        %v877 = vadd.f32 0.0, %v876
        %v878 = vpop.f32.mrf.mxu0
        %879 = vdwg.mxu0
        %v880 = vsel %vm698, %v874, -inf
        %881 = vmax.xlane.f32.xlu0 %v880
        %v882 = vpop.xlane.xlu0 %881
        %v883 = vsel %vm698, %v877, -inf
        %884 = vmax.xlane.f32.xlu0 %v883
        %v885 = vpop.xlane.xlu0 %884
        %v886 = vsub.f32 %v874, %v882
        %v887 = vsub.f32 %v877, %v885
        %v888 = vmul.f32 %v886, 1.442695
        %v889 = vpow.pop %v888
        %v890 = vmul.f32 %v887, 1.442695
        %v891 = vpow.pop %v890
        %v892 = vsel %vm698, %v889, 0.0
        %893 = vadd.xlane.f32.xlu0 %v892
        %v894 = vpop.xlane.xlu0 %893
        %v895 = vsel %vm698, %v891, 0.0
        %896 = vadd.xlane.f32.xlu0 %v895
        %v897 = vpop.xlane.xlu0 %896
        %v898 = vrcp.pop %v894
        %v899 = vrcp.pop %v897
        %v900 = vmul.f32 %v889, %v898
        %v901 = vmul.f32 %v891, %v899
        %v902 = vrcp.pop %v894
        %v903 = vmul.f32 %v889, %v902
        %v904 = vadd.f32 %v770, %v903
        %v905 = vpack.c.bf16 %v901, %v900
        %907 = vrot.lane.b32.xlu0 %v697, 112
        %v908 = vpop.permute.xlu0 %907
        %v911 = vsel %vm698, %v905, 0
        %913 = vmatprep.subr.bf16.mxu0 0
        %914 = vmatpush1.bf16.msra.mxu0 0
        %915 = vmatprep.subr.bf16.mxu0 0
        %916 = vmatpush1.bf16.msra.mxu0 0
        %917 = vmatprep.subr.bf16.mxu0 0
        %918 = vmatpush1.bf16.msra.mxu0 0
        %919 = vmatprep.subr.bf16.mxu0 0
        %920 = vmatpush1.bf16.msra.mxu0 0
        %921 = vmatprep.subr.bf16.mxu0 0
        %922 = vmatpush1.bf16.msra.mxu0 0
        %923 = vmatprep.subr.bf16.mxu0 0
        %924 = vmatpush1.bf16.msra.mxu0 0
        %925 = vmatprep.subr.bf16.mxu0 0
        %926 = vmatpush1.bf16.msra.mxu0 0
        %927 = vmatprep.subr.bf16.mxu0 0
        %928 = vmatpush1.bf16.msra.mxu0 %v908
        %929 = vmatprep.subr.bf16.mxu0 0
        %930 = vmatpush2.bf16.msra.mxu0 0
        %931 = vmatprep.subr.bf16.mxu0 0
        %932 = vmatpush2.bf16.msra.mxu0 0
        %933 = vmatprep.subr.bf16.mxu0 0
        %934 = vmatpush2.bf16.msra.mxu0 0
        %935 = vmatprep.subr.bf16.mxu0 0
        %936 = vmatpush2.bf16.msra.mxu0 0
        %937 = vmatprep.subr.bf16.mxu0 0
        %938 = vmatpush2.bf16.msra.mxu0 0
        %939 = vmatprep.subr.bf16.mxu0 0
        %940 = vmatpush2.bf16.msra.mxu0 0
        %941 = vmatprep.subr.bf16.mxu0 0
        %942 = vmatpush2.bf16.msra.mxu0 0
        %943 = vmatprep.subr.bf16.mxu0 0
        %944 = vmatpush2.bf16.msra.mxu0 0
        %945 = vmatprep.mubr.bf16.mxu0 0
        %946 = vmatmul.mubr.bf16.gmra.mxu0 %v911
        %v947 = vpop.f32.mrf.mxu0
        %v948 = vadd.f32 0.0, %v947
        %v949 = vpop.f32.mrf.mxu0
        %v950 = vpop.f32.mrf.mxu0
        %v951 = vadd.f32 0.0, %v950
        %v952 = vpop.f32.mrf.mxu0
        %953 = vdwg.mxu0
        %v954 = vpack.c.bf16 %v951, %v948
        %v956 = vunpack.c.l.b16 %v954
        %v957 = vunpack.c.h.b16 %v954
        %v958 = vpack.c.b16 %v956, %v956
        %v959 = vpack.c.b16 %v957, %v957
        %960 = vrot.lane.b32.xlu0 %v958, 16
        %v961 = vpop.permute.xlu0 %960
        %962 = vrot.lane.b32.xlu0 %v959, 16
        %v963 = vpop.permute.xlu0 %962
        %vm966 = vcmask 257152
        %967 = vst.msk [vmem:[#allocation2] sm:$0xf] %vm966, %v961
        %968 = vst.msk [vmem:[#allocation2 + $0x4] sm:$0xf] %vm966, %v963
        %969 = vrot.lane.b32.xlu0 %v549, 96
        %v970 = vpop.permute.xlu0 %969
        %971 = vrot.lane.b32.xlu0 %v623, 96
        %v972 = vpop.permute.xlu0 %971
        %v974 = vsel %vm698, %v970, 0
        %v977 = vsel %vm698, %v972, 0
        %979 = vmatprep.subr.bf16.mxu0 0
        %980 = vmatpush1.bf16.xpose.msra.mxu0 0
        %981 = vmatprep.subr.bf16.mxu0 0
        %982 = vmatpush1.bf16.xpose.msra.mxu0 0
        %983 = vmatprep.subr.bf16.mxu0 0
        %984 = vmatpush1.bf16.xpose.msra.mxu0 0
        %985 = vmatprep.subr.bf16.mxu0 0
        %986 = vmatpush1.bf16.xpose.msra.mxu0 0
        %987 = vmatprep.subr.bf16.mxu0 0
        %988 = vmatpush1.bf16.xpose.msra.mxu0 0
        %989 = vmatprep.subr.bf16.mxu0 0
        %990 = vmatpush1.bf16.xpose.msra.mxu0 0
        %991 = vmatprep.subr.bf16.mxu0 0
        %992 = vmatpush1.bf16.xpose.msra.mxu0 0
        %993 = vmatprep.subr.bf16.mxu0 0
        %994 = vmatpush1.bf16.xpose.msra.mxu0 %v977
        %995 = vmatprep.subr.bf16.mxu0 0
        %996 = vmatpush2.bf16.xpose.msra.mxu0 0
        %997 = vmatprep.subr.bf16.mxu0 0
        %998 = vmatpush2.bf16.xpose.msra.mxu0 0
        %999 = vmatprep.subr.bf16.mxu0 0
        %1000 = vmatpush2.bf16.xpose.msra.mxu0 0
        %1001 = vmatprep.subr.bf16.mxu0 0
        %1002 = vmatpush2.bf16.xpose.msra.mxu0 0
        %1003 = vmatprep.subr.bf16.mxu0 0
        %1004 = vmatpush2.bf16.xpose.msra.mxu0 0
        %1005 = vmatprep.subr.bf16.mxu0 0
        %1006 = vmatpush2.bf16.xpose.msra.mxu0 0
        %1007 = vmatprep.subr.bf16.mxu0 0
        %1008 = vmatpush2.bf16.xpose.msra.mxu0 0
        %1009 = vmatprep.subr.bf16.mxu0 0
        %1010 = vmatpush2.bf16.xpose.msra.mxu0 0
        %1011 = vmatprep.mubr.bf16.mxu0 0
        %1012 = vmatmul.mubr.bf16.gmra.mxu0 %v974
        %v1013 = vpop.f32.mrf.mxu0
        %v1014 = vadd.f32 0.0, %v1013
        %v1015 = vpop.f32.mrf.mxu0
        %v1016 = vpop.f32.mrf.mxu0
        %v1017 = vadd.f32 0.0, %v1016
        %v1018 = vpop.f32.mrf.mxu0
        %1019 = vdwg.mxu0
        %v1020 = vsel %vm698, %v1014, -inf
        %1021 = vmax.xlane.f32.xlu0 %v1020
        %v1022 = vpop.xlane.xlu0 %1021
        %v1023 = vsel %vm698, %v1017, -inf
        %1024 = vmax.xlane.f32.xlu0 %v1023
        %v1025 = vpop.xlane.xlu0 %1024
        %v1026 = vsub.f32 %v1014, %v1022
        %v1027 = vsub.f32 %v1017, %v1025
        %v1028 = vmul.f32 %v1026, 1.442695
        %v1029 = vpow.pop %v1028
        %v1030 = vmul.f32 %v1027, 1.442695
        %v1031 = vpow.pop %v1030
        %v1032 = vsel %vm698, %v1029, 0.0
        %1033 = vadd.xlane.f32.xlu0 %v1032
        %v1034 = vpop.xlane.xlu0 %1033
        %v1035 = vsel %vm698, %v1031, 0.0
        %1036 = vadd.xlane.f32.xlu0 %v1035
        %v1037 = vpop.xlane.xlu0 %1036
        %v1038 = vrcp.pop %v1034
        %v1039 = vrcp.pop %v1037
        %v1040 = vmul.f32 %v1029, %v1038
        %v1041 = vmul.f32 %v1031, %v1039
        %v1042 = vrcp.pop %v1034
        %v1043 = vmul.f32 %v1029, %v1042
        %v1044 = vadd.f32 %v904, %v1043
        %v1045 = vpack.c.bf16 %v1041, %v1040
        %1046 = vrot.lane.b32.xlu0 %v697, 96
        %v1047 = vpop.permute.xlu0 %1046
        %v1050 = vsel %vm698, %v1045, 0
        %1052 = vmatprep.subr.bf16.mxu0 0
        %1053 = vmatpush1.bf16.msra.mxu0 0
        %1054 = vmatprep.subr.bf16.mxu0 0
        %1055 = vmatpush1.bf16.msra.mxu0 0
        %1056 = vmatprep.subr.bf16.mxu0 0
        %1057 = vmatpush1.bf16.msra.mxu0 0
        %1058 = vmatprep.subr.bf16.mxu0 0
        %1059 = vmatpush1.bf16.msra.mxu0 0
        %1060 = vmatprep.subr.bf16.mxu0 0
        %1061 = vmatpush1.bf16.msra.mxu0 0
        %1062 = vmatprep.subr.bf16.mxu0 0
        %1063 = vmatpush1.bf16.msra.mxu0 0
        %1064 = vmatprep.subr.bf16.mxu0 0
        %1065 = vmatpush1.bf16.msra.mxu0 0
        %1066 = vmatprep.subr.bf16.mxu0 0
        %1067 = vmatpush1.bf16.msra.mxu0 %v1047
        %1068 = vmatprep.subr.bf16.mxu0 0
        %1069 = vmatpush2.bf16.msra.mxu0 0
        %1070 = vmatprep.subr.bf16.mxu0 0
        %1071 = vmatpush2.bf16.msra.mxu0 0
        %1072 = vmatprep.subr.bf16.mxu0 0
        %1073 = vmatpush2.bf16.msra.mxu0 0
        %1074 = vmatprep.subr.bf16.mxu0 0
        %1075 = vmatpush2.bf16.msra.mxu0 0
        %1076 = vmatprep.subr.bf16.mxu0 0
        %1077 = vmatpush2.bf16.msra.mxu0 0
        %1078 = vmatprep.subr.bf16.mxu0 0
        %1079 = vmatpush2.bf16.msra.mxu0 0
        %1080 = vmatprep.subr.bf16.mxu0 0
        %1081 = vmatpush2.bf16.msra.mxu0 0
        %1082 = vmatprep.subr.bf16.mxu0 0
        %1083 = vmatpush2.bf16.msra.mxu0 0
        %1084 = vmatprep.mubr.bf16.mxu0 0
        %1085 = vmatmul.mubr.bf16.gmra.mxu0 %v1050
        %v1086 = vpop.f32.mrf.mxu0
        %v1087 = vadd.f32 0.0, %v1086
        %v1088 = vpop.f32.mrf.mxu0
        %v1089 = vpop.f32.mrf.mxu0
        %v1090 = vadd.f32 0.0, %v1089
        %v1091 = vpop.f32.mrf.mxu0
        %1092 = vdwg.mxu0
        %v1093 = vpack.c.bf16 %v1090, %v1087
        %v1095 = vunpack.c.l.b16 %v1093
        %v1096 = vunpack.c.h.b16 %v1093
        %v1097 = vpack.c.b16 %v1095, %v1095
        %v1098 = vpack.c.b16 %v1096, %v1096
        %1099 = vrot.lane.b32.xlu0 %v1097, 32
        %v1100 = vpop.permute.xlu0 %1099
        %1101 = vrot.lane.b32.xlu0 %v1098, 32
        %v1102 = vpop.permute.xlu0 %1101
        %vm1105 = vcmask 388352
        %1106 = vst.msk [vmem:[#allocation2] sm:$0xf] %vm1105, %v1100
        %1107 = vst.msk [vmem:[#allocation2 + $0x4] sm:$0xf] %vm1105, %v1102
        %1108 = vrot.lane.b32.xlu0 %v549, 80
        %v1109 = vpop.permute.xlu0 %1108
        %1110 = vrot.lane.b32.xlu0 %v623, 80
        %v1111 = vpop.permute.xlu0 %1110
        %v1113 = vsel %vm698, %v1109, 0
        %v1116 = vsel %vm698, %v1111, 0
        %1118 = vmatprep.subr.bf16.mxu0 0
        %1119 = vmatpush1.bf16.xpose.msra.mxu0 0
        %1120 = vmatprep.subr.bf16.mxu0 0
        %1121 = vmatpush1.bf16.xpose.msra.mxu0 0
        %1122 = vmatprep.subr.bf16.mxu0 0
        %1123 = vmatpush1.bf16.xpose.msra.mxu0 0
        %1124 = vmatprep.subr.bf16.mxu0 0
        %1125 = vmatpush1.bf16.xpose.msra.mxu0 0
        %1126 = vmatprep.subr.bf16.mxu0 0
        %1127 = vmatpush1.bf16.xpose.msra.mxu0 0
        %1128 = vmatprep.subr.bf16.mxu0 0
        %1129 = vmatpush1.bf16.xpose.msra.mxu0 0
        %1130 = vmatprep.subr.bf16.mxu0 0
        %1131 = vmatpush1.bf16.xpose.msra.mxu0 0
        %1132 = vmatprep.subr.bf16.mxu0 0
        %1133 = vmatpush1.bf16.xpose.msra.mxu0 %v1116
        %1134 = vmatprep.subr.bf16.mxu0 0
        %1135 = vmatpush2.bf16.xpose.msra.mxu0 0
        %1136 = vmatprep.subr.bf16.mxu0 0
        %1137 = vmatpush2.bf16.xpose.msra.mxu0 0
        %1138 = vmatprep.subr.bf16.mxu0 0
        %1139 = vmatpush2.bf16.xpose.msra.mxu0 0
        %1140 = vmatprep.subr.bf16.mxu0 0
        %1141 = vmatpush2.bf16.xpose.msra.mxu0 0
        %1142 = vmatprep.subr.bf16.mxu0 0
        %1143 = vmatpush2.bf16.xpose.msra.mxu0 0
        %1144 = vmatprep.subr.bf16.mxu0 0
        %1145 = vmatpush2.bf16.xpose.msra.mxu0 0
        %1146 = vmatprep.subr.bf16.mxu0 0
        %1147 = vmatpush2.bf16.xpose.msra.mxu0 0
        %1148 = vmatprep.subr.bf16.mxu0 0
        %1149 = vmatpush2.bf16.xpose.msra.mxu0 0
        %1150 = vmatprep.mubr.bf16.mxu0 0
        %1151 = vmatmul.mubr.bf16.gmra.mxu0 %v1113
        %v1152 = vpop.f32.mrf.mxu0
        %v1153 = vadd.f32 0.0, %v1152
        %v1154 = vpop.f32.mrf.mxu0
        %v1155 = vpop.f32.mrf.mxu0
        %v1156 = vadd.f32 0.0, %v1155
        %v1157 = vpop.f32.mrf.mxu0
        %1158 = vdwg.mxu0
        %v1159 = vsel %vm698, %v1153, -inf
        %1160 = vmax.xlane.f32.xlu0 %v1159
        %v1161 = vpop.xlane.xlu0 %1160
        %v1162 = vsel %vm698, %v1156, -inf
        %1163 = vmax.xlane.f32.xlu0 %v1162
        %v1164 = vpop.xlane.xlu0 %1163
        %v1165 = vsub.f32 %v1153, %v1161
        %v1166 = vsub.f32 %v1156, %v1164
        %v1167 = vmul.f32 %v1165, 1.442695
        %v1168 = vpow.pop %v1167
        %v1169 = vmul.f32 %v1166, 1.442695
        %v1170 = vpow.pop %v1169
        %v1171 = vsel %vm698, %v1168, 0.0
        %1172 = vadd.xlane.f32.xlu0 %v1171
        %v1173 = vpop.xlane.xlu0 %1172
        %v1174 = vsel %vm698, %v1170, 0.0
        %1175 = vadd.xlane.f32.xlu0 %v1174
        %v1176 = vpop.xlane.xlu0 %1175
        %v1177 = vrcp.pop %v1173
        %v1178 = vrcp.pop %v1176
        %v1179 = vmul.f32 %v1168, %v1177
        %v1180 = vmul.f32 %v1170, %v1178
        %v1181 = vrcp.pop %v1173
        %v1182 = vmul.f32 %v1168, %v1181
        %v1183 = vadd.f32 %v1044, %v1182
        %v1184 = vpack.c.bf16 %v1180, %v1179
        %1185 = vrot.lane.b32.xlu0 %v697, 80
        %v1186 = vpop.permute.xlu0 %1185
        %v1189 = vsel %vm698, %v1184, 0
        %1191 = vmatprep.subr.bf16.mxu0 0
        %1192 = vmatpush1.bf16.msra.mxu0 0
        %1193 = vmatprep.subr.bf16.mxu0 0
        %1194 = vmatpush1.bf16.msra.mxu0 0
        %1195 = vmatprep.subr.bf16.mxu0 0
        %1196 = vmatpush1.bf16.msra.mxu0 0
        %1197 = vmatprep.subr.bf16.mxu0 0
        %1198 = vmatpush1.bf16.msra.mxu0 0
        %1199 = vmatprep.subr.bf16.mxu0 0
        %1200 = vmatpush1.bf16.msra.mxu0 0
        %1201 = vmatprep.subr.bf16.mxu0 0
        %1202 = vmatpush1.bf16.msra.mxu0 0
        %1203 = vmatprep.subr.bf16.mxu0 0
        %1204 = vmatpush1.bf16.msra.mxu0 0
        %1205 = vmatprep.subr.bf16.mxu0 0
        %1206 = vmatpush1.bf16.msra.mxu0 %v1186
        %1207 = vmatprep.subr.bf16.mxu0 0
        %1208 = vmatpush2.bf16.msra.mxu0 0
        %1209 = vmatprep.subr.bf16.mxu0 0
        %1210 = vmatpush2.bf16.msra.mxu0 0
        %1211 = vmatprep.subr.bf16.mxu0 0
        %1212 = vmatpush2.bf16.msra.mxu0 0
        %1213 = vmatprep.subr.bf16.mxu0 0
        %1214 = vmatpush2.bf16.msra.mxu0 0
        %1215 = vmatprep.subr.bf16.mxu0 0
        %1216 = vmatpush2.bf16.msra.mxu0 0
        %1217 = vmatprep.subr.bf16.mxu0 0
        %1218 = vmatpush2.bf16.msra.mxu0 0
        %1219 = vmatprep.subr.bf16.mxu0 0
        %1220 = vmatpush2.bf16.msra.mxu0 0
        %1221 = vmatprep.subr.bf16.mxu0 0
        %1222 = vmatpush2.bf16.msra.mxu0 0
        %1223 = vmatprep.mubr.bf16.mxu0 0
        %1224 = vmatmul.mubr.bf16.gmra.mxu0 %v1189
        %v1225 = vpop.f32.mrf.mxu0
        %v1226 = vadd.f32 0.0, %v1225
        %v1227 = vpop.f32.mrf.mxu0
        %v1228 = vpop.f32.mrf.mxu0
        %v1229 = vadd.f32 0.0, %v1228
        %v1230 = vpop.f32.mrf.mxu0
        %1231 = vdwg.mxu0
        %v1232 = vpack.c.bf16 %v1229, %v1226
        %v1234 = vunpack.c.l.b16 %v1232
        %v1235 = vunpack.c.h.b16 %v1232
        %v1236 = vpack.c.b16 %v1234, %v1234
        %v1237 = vpack.c.b16 %v1235, %v1235
        %1238 = vrot.lane.b32.xlu0 %v1236, 48
        %v1239 = vpop.permute.xlu0 %1238
        %1240 = vrot.lane.b32.xlu0 %v1237, 48
        %v1241 = vpop.permute.xlu0 %1240
        %vm1244 = vcmask 519552
        %1245 = vst.msk [vmem:[#allocation2] sm:$0xf] %vm1244, %v1239
        %1246 = vst.msk [vmem:[#allocation2 + $0x4] sm:$0xf] %vm1244, %v1241
        %v1247 = vld [vmem:[#allocation2] sm:$0xf]
        %v1248 = vld [vmem:[#allocation2 + $0x4] sm:$0xf]
        %v1249 = vld [vmem:[#allocation11] sm:$0xf]
        %v1250 = vld [vmem:[#allocation11 + $0x4] sm:$0xf]
        %v1251 = vld [vmem:[#allocation11 + $0x8] sm:$0xf]
        %v1252 = vld [vmem:[#allocation11 + $0xc] sm:$0xf]
        %v1253 = vld [vmem:[#allocation11 + $0x10] sm:$0xf]
        %v1254 = vld [vmem:[#allocation11 + $0x14] sm:$0xf]
        %v1255 = vld [vmem:[#allocation11 + $0x18] sm:$0xf]
        %v1256 = vld [vmem:[#allocation11 + $0x1c] sm:$0xf]
        %v1257 = vld [vmem:[%s7] sm:$0x1]
        %v1259 = vlaneseq
        %v1260 = vshrl.u32 %v1259, 7
        %v1261 = vsub.s32 0, %v1260
        %v1262 = vrot.slane %v1257, %v1261
        %v1266 = vunpack.c.l.b16 %v1247
        %v1267 = vunpack.c.l.b16 %v1248
        %v1268 = vpack.c.b16 %v1267, %v1266
        %v1277 = vunpack.c.l.b16 %v1249
        %v1278 = vunpack.c.l.b16 %v1250
        %v1279 = vunpack.c.l.b16 %v1251
        %v1280 = vunpack.c.l.b16 %v1252
        %v1281 = vunpack.c.l.b16 %v1253
        %v1282 = vunpack.c.l.b16 %v1254
        %v1283 = vunpack.c.l.b16 %v1255
        %v1284 = vunpack.c.l.b16 %v1256
        %v1285 = vpack.c.b16 %v1278, %v1277
        %v1286 = vpack.c.b16 %v1280, %v1279
        %v1287 = vpack.c.b16 %v1282, %v1281
        %v1288 = vpack.c.b16 %v1284, %v1283
        %v1294 = vsel %vm426, %v1268, 0
        %1296 = vmatprep.subr.bf16.mxu0 0
        %1297 = vmatpush1.bf16.msra.mxu0 0
        %1298 = vmatprep.subr.bf16.mxu0 0
        %1299 = vmatpush1.bf16.msra.mxu0 0
        %1300 = vmatprep.subr.bf16.mxu0 0
        %1301 = vmatpush1.bf16.msra.mxu0 0
        %1302 = vmatprep.subr.bf16.mxu0 0
        %1303 = vmatpush1.bf16.msra.mxu0 0
        %1304 = vmatprep.subr.bf16.mxu0 0
        %1305 = vmatpush1.bf16.msra.mxu0 %v1288
        %1306 = vmatprep.subr.bf16.mxu0 0
        %1307 = vmatpush1.bf16.msra.mxu0 %v1287
        %1308 = vmatprep.subr.bf16.mxu0 0
        %1309 = vmatpush1.bf16.msra.mxu0 %v1286
        %1310 = vmatprep.subr.bf16.mxu0 0
        %1311 = vmatpush1.bf16.msra.mxu0 %v1285
        %1312 = vmatprep.subr.bf16.mxu0 0
        %1313 = vmatpush2.bf16.msra.mxu0 0
        %1314 = vmatprep.subr.bf16.mxu0 0
        %1315 = vmatpush2.bf16.msra.mxu0 0
        %1316 = vmatprep.subr.bf16.mxu0 0
        %1317 = vmatpush2.bf16.msra.mxu0 0
        %1318 = vmatprep.subr.bf16.mxu0 0
        %1319 = vmatpush2.bf16.msra.mxu0 0
        %1320 = vmatprep.subr.bf16.mxu0 0
        %1321 = vmatpush2.bf16.msra.mxu0 0
        %1322 = vmatprep.subr.bf16.mxu0 0
        %1323 = vmatpush2.bf16.msra.mxu0 0
        %1324 = vmatprep.subr.bf16.mxu0 0
        %1325 = vmatpush2.bf16.msra.mxu0 0
        %1326 = vmatprep.subr.bf16.mxu0 0
        %1327 = vmatpush2.bf16.msra.mxu0 0
        %1328 = vmatprep.mubr.bf16.mxu0 0
        %1329 = vmatmul.mubr.bf16.gmra.mxu0 %v1294
        %v1330 = vpop.f32.mrf.mxu0
        %v1331 = vadd.f32 %v1262, %v1330
        %v1332 = vpop.f32.mrf.mxu0
        %v1333 = vpop.f32.mrf.mxu0
        %v1334 = vadd.f32 %v1262, %v1333
        %v1335 = vpop.f32.mrf.mxu0
        %1336 = vdwg.mxu0
        %v1337 = vadd.f32 %v422, %v1331
        %v1338 = vadd.f32 %v423, %v1334
        %1339 = vst.msk [vmem:[%s412] sm:$0xff] %vm426, %v1337
        %1340 = vst.msk [vmem:[%s412 + $0x8] sm:$0xff] %vm426, %v1338
        %v1341 = vmul.f32 %v1183, 0.25
        %vm1342 = vcmask 122880
        %1343 = vst.msk [vmem:[%s418] sm:$0x1] %vm1342, %v1341
        %s1344 = sand.u32 %s213, 1
        %s1345 = scalar_lea.sflag [#allocation5], %s1344
        %s1346 = sand.u32 %s213, 1
        %s1347 = smul.addr %s1346, 16
        %s1348 = scalar_lea.vmem [#allocation12], %s1347
        %s1349 = sand.u32 %s239, 1
        %s1350 = scalar_lea.sflag [#allocation14], %s1349
        %s1351 = sand.u32 %s239, 1
        %s1352 = scalar_lea.vmem [#allocation13], %s1351
        // Predicated region
        $region73: #{tpu_custom_call.1} parent=51 // pred_check
          %p1353 = pneg %p223
        $region74: #{tpu_custom_call.1} parent=51 // pred_check_branch
          %1355 = sbr.rel (%p1353) target = $region76
        $region75: #{tpu_custom_call.1} parent=51 // pred_region
          %s1356 = smul.u32 2, %s32
          %s1358 = ssub.s32 256, 256
          %1359 = vsyncadd %s1345, %s1358
          %s1360 = smul.addr %s1356, 128
          %s1361 = scalar_lea.hbm %s8, %s1360
          %s1362 = sshll.u32 %s1348, 4
          %s1363 = int_to_ptr.vmem [resolvable:$true] %s1362
          %1368 = dma.vmem_to_hbm [thread:$0]  %s1363, 256, %s1361, %s1345, 128, 128, 8
        $region76: #{tpu_custom_call.1} parent=51 // pred_fallthru
          _
        // Predicated region
        $region77: #{tpu_custom_call.1} parent=51 // pred_check
          %p1369 = pneg %p249
        $region78: #{tpu_custom_call.1} parent=51 // pred_check_branch
          %1371 = sbr.rel (%p1369) target = $region80
        $region79: #{tpu_custom_call.1} parent=51 // pred_region
          %s1373 = ssub.s32 16, 16
          %1374 = vsyncadd %s1350, %s1373
          %s1375 = smul.addr %s32, 16
          %s1376 = scalar_lea.hbm %s9, %s1375
          %s1378 = sshll.u32 %s1352, 4
          %s1379 = int_to_ptr.vmem [resolvable:$true] %s1378
          %1381 = dma.vmem_to_hbm [thread:$0]  %s1379, 16, %s1376, %s1350
        $region80: #{tpu_custom_call.1} parent=51 // pred_fallthru
          _
      $region52: #{tpu_custom_call.1} parent=5 // pred_fallthru
        _
      %p1382 = scmp.le.s32.totalorder 2, %s27
      // Predicated region
      $region81: #{tpu_custom_call.1} parent=5 // pred_check
        %p1383 = pneg %p1382
      $region82: #{tpu_custom_call.1} parent=5 // pred_check_branch
        %1385 = sbr.rel (%p1383) target = $region84
      $region83: #{tpu_custom_call.1} parent=5 // pred_region
        %s1386 = ssub.s32 %s27, 2
        // Predicated region
        $region85: #{tpu_custom_call.1} parent=83 // pred_check
          %p1387 = pneg %p229
        $region86: #{tpu_custom_call.1} parent=83 // pred_check_branch
          %1389 = sbr.rel (%p1387) target = $region88
        $region87: #{tpu_custom_call.1} parent=83 // pred_region
          %s1390 = sand.u32 %s214, 1
          %s1391 = scalar_lea.sflag [#allocation5], %s1390
          %s1392 = sand.u32 %s214, 1
          %s1393 = smul.addr %s1392, 16
          %s1394 = scalar_lea.vmem [#allocation12], %s1393
          %1395 = dma.done %s1391, 256
        $region88: #{tpu_custom_call.1} parent=83 // pred_fallthru
          _
        // Predicated region
        $region89: #{tpu_custom_call.1} parent=83 // pred_check
          %p1396 = pneg %p255
        $region90: #{tpu_custom_call.1} parent=83 // pred_check_branch
          %1398 = sbr.rel (%p1396) target = $region92
        $region91: #{tpu_custom_call.1} parent=83 // pred_region
          %s1399 = sand.u32 %s240, 1
          %s1400 = scalar_lea.sflag [#allocation14], %s1399
          %s1401 = sand.u32 %s240, 1
          %s1402 = scalar_lea.vmem [#allocation13], %s1401
          %1403 = dma.done %s1400, 16
        $region92: #{tpu_custom_call.1} parent=83 // pred_fallthru
          _
      $region84: #{tpu_custom_call.1} parent=5 // pred_fallthru
        _
    $region6: #{tpu_custom_call.1} parent=1 // loop_footer
      %s31 = sadd.s32 1, %s27
    $region7: #{tpu_custom_call.1} parent=1 // loop_footer_branch
      %26 = sbr.rel target = $region3
    $region8: #{tpu_custom_call.1} parent=1 // loop_exit
      _
    %1404 = vsyncpa [#allocation4], 1
    %s1405 = scalar_lea.sflag [#allocation4], 1
    %1406 = vsyncpa %s1405, 1
    %1407 = vsyncpa [#allocation7], 1
    %1408 = vsyncpa [#allocation10], 1
    %1409 = vsyncpa [#allocation5], 1
    %s1410 = scalar_lea.sflag [#allocation5], 1
    %1411 = vsyncpa %s1410, 1
    %1412 = vsyncpa [#allocation14], 1
    %s1413 = scalar_lea.sflag [#allocation14], 1
    %1414 = vsyncpa %s1413, 1

</llo_original>
